<compile_context>
chip_gen: v6e
topology: v6e:2x2x1
jax: 0.10.0
libtpu: 0.0.40
codegen_flags: <defaults>
</compile_context>

<pallas_src>
import functools

import jax
import jax.numpy as jnp
from jax.experimental import pallas as pl
from jax.experimental.pallas import tpu as pltpu

# ---------------- constants (match the PyTorch module) ----------------
_K1 = (1.0 / 16.0, 4.0 / 16.0, 6.0 / 16.0, 4.0 / 16.0, 1.0 / 16.0)  # outer(k1,k1)=gauss/256

_A = [[10135552 / 24577794, 8788810 / 24577794, 4435075 / 24577794],
      [2613072 / 12288897, 8788810 / 12288897, 887015 / 12288897],
      [1425312 / 73733382, 8788810 / 73733382, 70074185 / 73733382]]
_INV_ILLUM = [1.052156925, 1.0, 0.91835767]


# ---------------- Pallas kernels ----------------
def _blur_kernel(xp_ref, out_ref):
    """Separable 5x5 Gaussian blur on one reflect-padded channel image.

    xp_ref:  (1, H+4, W+4) f32
    out_ref: (1, H, W)     f32
    """
    H = out_ref.shape[1]
    W = out_ref.shape[2]
    row = xp_ref[0]                                    # (H+4, W+4)

    # horizontal 5-tap pass (unit-stride static lane slices)
    acc = _K1[0] * row[:, 0:W]
    for b in range(1, 5):
        acc = acc + _K1[b] * row[:, b:b + W]

    # vertical 5-tap pass (unit-stride static sublane slices)
    out = _K1[0] * acc[0:H, :]
    for a in range(1, 5):
        out = out + _K1[a] * acc[a:a + H, :]
    out_ref[0] = out


def _csf_kernel(x_ref, out_ref):
    """sRGB -> CIELab.  x_ref/out_ref: (N, 3, H*W) f32 (lane axis = H*W)."""
    x = x_ref[...]
    limit = 0.04045
    lin = jnp.where(
        x > limit,
        jnp.exp(2.4 * jnp.log((jnp.maximum(x, limit) + 0.055) / 1.055)),
        x / 12.92)
    t0 = lin[:, 0:1, :]
    t1 = lin[:, 1:2, :]
    t2 = lin[:, 2:3, :]
    c0 = (_A[0][0] * t0 + _A[0][1] * t1 + _A[0][2] * t2) * _INV_ILLUM[0]
    c1 = (_A[1][0] * t0 + _A[1][1] * t1 + _A[1][2] * t2) * _INV_ILLUM[1]
    c2 = (_A[2][0] * t0 + _A[2][1] * t1 + _A[2][2] * t2) * _INV_ILLUM[2]
    delta = 6.0 / 29.0
    d2 = delta * delta
    d3 = delta * d2
    factor = 1.0 / (3.0 * d2)

    def f(t):
        cube_root = jnp.exp((1.0 / 3.0) * jnp.log(jnp.maximum(t, d3)))
        return jnp.where(t > d3, cube_root, factor * t + 4.0 / 29.0)

    f0, f1, f2 = f(c0), f(c1), f(c2)
    out_ref[:, 0:1, :] = (116.0 * f1 - 16.0).astype(out_ref.dtype)   # L
    out_ref[:, 1:2, :] = (500.0 * (f0 - f1)).astype(out_ref.dtype)   # a
    out_ref[:, 2:3, :] = (200.0 * (f1 - f2)).astype(out_ref.dtype)   # b


def _proj_matmul_kernel(w_ref, p_ref, out_ref):
    """Lane-dense random projection: (P, K) @ (K, TM) -> (P, TM), f32 acc."""
    out_ref[...] = jnp.dot(w_ref[...], p_ref[...],
                           preferred_element_type=jnp.float32)


def _swd_kernel(px_ref, py_ref, out_ref):
    """px/py: (P, N, HW) sorted projections; out: (N, 128) per-batch mean |diff|."""
    diff = jnp.abs(px_ref[...] - py_ref[...])          # (P, N, HW)
    s0 = jnp.sum(diff, axis=0)                         # (N, HW)
    per_n = jnp.sum(s0, axis=1, keepdims=True)         # (N, 1)
    denom = float(diff.shape[0] * diff.shape[2])
    out_ref[...] = jnp.broadcast_to(per_n / denom, out_ref.shape)


# ---------------- wrappers ----------------
def gauss_blur_downsample(img):
    """Blur (reflect pad 2, 5x5 gauss) then take [::2, ::2]."""
    N, C, H, W = img.shape
    xp = jnp.pad(img.astype(jnp.float32),
                 ((0, 0), (0, 0), (2, 2), (2, 2)), mode='reflect')
    xp = xp.reshape(N * C, H + 4, W + 4)
    out = pl.pallas_call(
        _blur_kernel,
        out_shape=jax.ShapeDtypeStruct((N * C, H, W), jnp.float32),
        grid=(N * C,),
        in_specs=[pl.BlockSpec((1, H + 4, W + 4), lambda i: (i, 0, 0))],
        out_specs=pl.BlockSpec((1, H, W), lambda i: (i, 0, 0)),
        compiler_params=pltpu.CompilerParams(
            dimension_semantics=("parallel",)),
    )(xp)
    # TODO(synk): the ::2 decimation is kept in XLA; fusing it needs strided
    # VMEM loads whose Mosaic support is shape-dependent.
    return out.reshape(N, C, H, W)[:, :, ::2, ::2]


def color_space_transform(img):
    N, C, H, W = img.shape
    x = img.astype(jnp.float32).reshape(N, C, H * W)
    out = pl.pallas_call(
        _csf_kernel,
        out_shape=jax.ShapeDtypeStruct((N, C, H * W), jnp.float32),
        grid=(1,),
        in_specs=[pl.BlockSpec((N, C, H * W), lambda i: (0, 0, 0))],
        out_specs=pl.BlockSpec((N, C, H * W), lambda i: (0, 0, 0)),
    )(x)
    return out.reshape(N, C, H, W)


def sample_projections(key, num_proj, c, patch_size):
    """Stand-in for torch.randn + row-normalization (different RNG stream)."""
    k = c * patch_size * patch_size
    rand = jax.random.normal(key, (num_proj, k), jnp.float32)
    rand = rand / jnp.linalg.norm(rand, axis=1, keepdims=True)
    return rand  # row p is the flattened (c, kh, kw) conv filter


def _patches_km(img, patch_size):
    """(N, C, H, W) -> (C*ps*ps, N*H*W) im2col in (c,kh,kw)-major K order."""
    N, C, H, W = img.shape
    pad = patch_size // 2
    xp = jnp.pad(img, ((0, 0), (0, 0), (pad, pad), (pad, pad)), mode='reflect')
    rows = []
    for c in range(C):
        for kh in range(patch_size):
            for kw in range(patch_size):
                rows.append(xp[:, c, kh:kh + H, kw:kw + W].reshape(N * H * W))
    # TODO(synk): fully fusing im2col into the matmul kernel needs overlapping
    # halo DMA (manual async copies); left to XLA here but built directly in
    # (K, M) order so no large transpose is materialized.
    return jnp.stack(rows, axis=0)


def forward_once(x_lab, y_lab, rand, patch_size):
    N, C, H, W = x_lab.shape
    P, K = rand.shape
    HW = H * W
    M = N * HW

    # one patch matrix for x and y together -> single projection matmul
    pats = jnp.concatenate(
        [_patches_km(x_lab, patch_size), _patches_km(y_lab, patch_size)], axis=1)

    Kp = ((K + 127) // 128) * 128
    TM = 128 if 2 * M <= 1024 else 512
    Mp = ((2 * M + TM - 1) // TM) * TM
    pats = jnp.pad(pats, ((0, Kp - K), (0, Mp - 2 * M))).astype(jnp.bfloat16)
    w = jnp.pad(rand, ((0, 0), (0, Kp - K))).astype(jnp.bfloat16)   # (P, Kp)

    proj = pl.pallas_call(
        _proj_matmul_kernel,
        out_shape=jax.ShapeDtypeStruct((P, Mp), jnp.float32),
        grid=(Mp // TM,),
        in_specs=[pl.BlockSpec((P, Kp), lambda i: (0, 0)),    # weights resident
                  pl.BlockSpec((Kp, TM), lambda i: (0, i))],  # M tiled
        out_specs=pl.BlockSpec((P, TM), lambda i: (0, i)),    # lane-dense store
        compiler_params=pltpu.CompilerParams(
            dimension_semantics=("parallel",),
            vmem_limit_bytes=32 * 1024 * 1024),
    )(w, pats)

    projx = proj[:, :M].reshape(P, N, HW)
    projy = proj[:, M:2 * M].reshape(P, N, HW)

    # TODO(synk): torch.sort has no native Pallas-TPU primitive; XLA sort along
    # the contiguous last axis (layout already matches, no transposes needed).
    projx = jnp.sort(projx, axis=-1)
    projy = jnp.sort(projy, axis=-1)

    out = pl.pallas_call(
        _swd_kernel,
        out_shape=jax.ShapeDtypeStruct((N, 128), jnp.float32),
        grid=(1,),
        in_specs=[pl.BlockSpec((P, N, HW), lambda i: (0, 0, 0)),
                  pl.BlockSpec((P, N, HW), lambda i: (0, 0, 0))],
        out_specs=pl.BlockSpec((N, 128), lambda i: (0, 0)),
    )(projx, projy)
    return out[:, 0]  # per-batch mean over projections and spatial positions


def msswd_loss_forward(x, y, key, num_scale=3, num_proj=24, patch_size=11,
                       loss_weight=1.0):
    # In the reference, `ms_swd = ms_swd + swd` sits OUTSIDE the scale loop, so
    # only the LAST scale's swd contributes.  We therefore only build the final
    # pyramid level and run CSF / projection / sort / SWD once (same result,
    # ~num_scale x less work).
    xs, ys = x, y
    for _ in range(num_scale - 1):
        xs = gauss_blur_downsample(xs)
        ys = gauss_blur_downsample(ys)

    x_lab = color_space_transform(xs)
    y_lab = color_space_transform(ys)

    # reset_projections=True: the final scale uses the (num_scale-1)-th resample.
    rand = sample_projections(jax.random.fold_in(key, num_scale - 1),
                              num_proj, 3, patch_size)
    swd = forward_once(x_lab, y_lab, rand, patch_size)

    ms_swd = swd / num_scale
    return ms_swd.mean() * 0.1 * loss_weight


if __name__ == "__main__":
    # spatial=24 so the deepest pyramid scale (6x6) still supports the reflect
    # padding of patch_size//2 = 5 (PyTorch would error otherwise).
    key = jax.random.PRNGKey(0)
    kx, ky, kp = jax.random.split(key, 3)
    x = jax.random.uniform(kx, (2, 3, 24, 24), jnp.float32)
    y = jax.random.uniform(ky, (2, 3, 24, 24), jnp.float32)

    loss_fn = jax.jit(functools.partial(msswd_loss_forward,
                                        num_scale=3, num_proj=24,
                                        patch_size=11, loss_weight=1.0))
    loss = loss_fn(x, y, kp)
    jax.block_until_ready(loss)
    assert loss.shape == () and bool(jnp.isfinite(loss))
    print("KERNEL_OK")
</pallas_src>

<mosaic_0001>
module attributes {stable_mosaic.version = 11 : i64} {
  func.func @_blur_kernel(%arg0: i32, %arg1: memref<1x28x28xf32, #tpu.memory_space<vmem>>, %arg2: memref<1x24x24xf32, #tpu.memory_space<vmem>>) attributes {dimension_semantics = [#tpu.dimension_semantics<parallel>], iteration_bounds = array<i64: 6>, scalar_prefetch = 0 : i64, scratch_operands = 0 : i64, tpu.core_type = #tpu.core_type<tc>, window_params = [{transform_indices = @transform_0, window_bounds = array<i64: 1, 28, 28>}, {transform_indices = @transform_1, window_bounds = array<i64: 1, 24, 24>}]} {
    %c0 = arith.constant 0 : index
    %c0_0 = arith.constant 0 : index
    %c0_1 = arith.constant 0 : index
    %0 = vector.load %arg1[%c0, %c0_0, %c0_1] : memref<1x28x28xf32, #tpu.memory_space<vmem>>, vector<1x28x28xf32>
    %1 = vector.shape_cast %0 : vector<1x28x28xf32> to vector<28x28xf32>
    %2 = vector.extract_strided_slice %1 {offsets = [0, 0], sizes = [28, 24], strides = [1, 1]} : vector<28x28xf32> to vector<28x24xf32>
    %cst = arith.constant 6.250000e-02 : f32
    %3 = vector.broadcast %cst : f32 to vector<28x24xf32>
    %4 = arith.mulf %3, %2 : vector<28x24xf32>
    %5 = vector.extract_strided_slice %1 {offsets = [0, 1], sizes = [28, 24], strides = [1, 1]} : vector<28x28xf32> to vector<28x24xf32>
    %cst_2 = arith.constant 2.500000e-01 : f32
    %6 = vector.broadcast %cst_2 : f32 to vector<28x24xf32>
    %7 = arith.mulf %6, %5 : vector<28x24xf32>
    %8 = arith.addf %4, %7 : vector<28x24xf32>
    %9 = vector.extract_strided_slice %1 {offsets = [0, 2], sizes = [28, 24], strides = [1, 1]} : vector<28x28xf32> to vector<28x24xf32>
    %cst_3 = arith.constant 3.750000e-01 : f32
    %10 = vector.broadcast %cst_3 : f32 to vector<28x24xf32>
    %11 = arith.mulf %10, %9 : vector<28x24xf32>
    %12 = arith.addf %8, %11 : vector<28x24xf32>
    %13 = vector.extract_strided_slice %1 {offsets = [0, 3], sizes = [28, 24], strides = [1, 1]} : vector<28x28xf32> to vector<28x24xf32>
    %cst_4 = arith.constant 2.500000e-01 : f32
    %14 = vector.broadcast %cst_4 : f32 to vector<28x24xf32>
    %15 = arith.mulf %14, %13 : vector<28x24xf32>
    %16 = arith.addf %12, %15 : vector<28x24xf32>
    %17 = vector.extract_strided_slice %1 {offsets = [0, 4], sizes = [28, 24], strides = [1, 1]} : vector<28x28xf32> to vector<28x24xf32>
    %cst_5 = arith.constant 6.250000e-02 : f32
    %18 = vector.broadcast %cst_5 : f32 to vector<28x24xf32>
    %19 = arith.mulf %18, %17 : vector<28x24xf32>
    %20 = arith.addf %16, %19 : vector<28x24xf32>
    %21 = vector.extract_strided_slice %20 {offsets = [0, 0], sizes = [24, 24], strides = [1, 1]} : vector<28x24xf32> to vector<24x24xf32>
    %cst_6 = arith.constant 6.250000e-02 : f32
    %22 = vector.broadcast %cst_6 : f32 to vector<24x24xf32>
    %23 = arith.mulf %22, %21 : vector<24x24xf32>
    %24 = vector.extract_strided_slice %20 {offsets = [1, 0], sizes = [24, 24], strides = [1, 1]} : vector<28x24xf32> to vector<24x24xf32>
    %cst_7 = arith.constant 2.500000e-01 : f32
    %25 = vector.broadcast %cst_7 : f32 to vector<24x24xf32>
    %26 = arith.mulf %25, %24 : vector<24x24xf32>
    %27 = arith.addf %23, %26 : vector<24x24xf32>
    %28 = vector.extract_strided_slice %20 {offsets = [2, 0], sizes = [24, 24], strides = [1, 1]} : vector<28x24xf32> to vector<24x24xf32>
    %cst_8 = arith.constant 3.750000e-01 : f32
    %29 = vector.broadcast %cst_8 : f32 to vector<24x24xf32>
    %30 = arith.mulf %29, %28 : vector<24x24xf32>
    %31 = arith.addf %27, %30 : vector<24x24xf32>
    %32 = vector.extract_strided_slice %20 {offsets = [3, 0], sizes = [24, 24], strides = [1, 1]} : vector<28x24xf32> to vector<24x24xf32>
    %cst_9 = arith.constant 2.500000e-01 : f32
    %33 = vector.broadcast %cst_9 : f32 to vector<24x24xf32>
    %34 = arith.mulf %33, %32 : vector<24x24xf32>
    %35 = arith.addf %31, %34 : vector<24x24xf32>
    %36 = vector.extract_strided_slice %20 {offsets = [4, 0], sizes = [24, 24], strides = [1, 1]} : vector<28x24xf32> to vector<24x24xf32>
    %cst_10 = arith.constant 6.250000e-02 : f32
    %37 = vector.broadcast %cst_10 : f32 to vector<24x24xf32>
    %38 = arith.mulf %37, %36 : vector<24x24xf32>
    %39 = arith.addf %35, %38 : vector<24x24xf32>
    %c0_11 = arith.constant 0 : index
    %c0_12 = arith.constant 0 : index
    %c0_13 = arith.constant 0 : index
    %40 = vector.load %arg2[%c0_11, %c0_12, %c0_13] : memref<1x24x24xf32, #tpu.memory_space<vmem>>, vector<1x24x24xf32>
    %41 = vector.shape_cast %40 : vector<1x24x24xf32> to vector<24x24xf32>
    %42 = vector.shape_cast %39 : vector<24x24xf32> to vector<1x24x24xf32>
    tpu.vector_store %arg2[%c0_11, %c0_12, %c0_13], %42 {strides = array<i32>} : memref<1x24x24xf32, #tpu.memory_space<vmem>>, vector<1x24x24xf32>,
    return
  }
  func.func @transform_0(%arg0: i32) -> (i32, i32, i32) {
    %c0_i32 = arith.constant 0 : i32
    %c0_i32_0 = arith.constant 0 : i32
    %c0_i32_1 = arith.constant 0 : i32
    return %arg0, %c0_i32, %c0_i32_0 : i32, i32, i32
  }
  func.func @transform_1(%arg0: i32) -> (i32, i32, i32) {
    %c0_i32 = arith.constant 0 : i32
    %c0_i32_0 = arith.constant 0 : i32
    %c0_i32_1 = arith.constant 0 : i32
    return %arg0, %c0_i32, %c0_i32_0 : i32, i32, i32
  }
}

module attributes {stable_mosaic.version = 11 : i64} {
  func.func @_blur_kernel(%arg0: i32, %arg1: memref<1x16x16xf32, #tpu.memory_space<vmem>>, %arg2: memref<1x12x12xf32, #tpu.memory_space<vmem>>) attributes {dimension_semantics = [#tpu.dimension_semantics<parallel>], iteration_bounds = array<i64: 6>, scalar_prefetch = 0 : i64, scratch_operands = 0 : i64, tpu.core_type = #tpu.core_type<tc>, window_params = [{transform_indices = @transform_0, window_bounds = array<i64: 1, 16, 16>}, {transform_indices = @transform_1, window_bounds = array<i64: 1, 12, 12>}]} {
    %c0 = arith.constant 0 : index
    %c0_0 = arith.constant 0 : index
    %c0_1 = arith.constant 0 : index
    %0 = vector.load %arg1[%c0, %c0_0, %c0_1] : memref<1x16x16xf32, #tpu.memory_space<vmem>>, vector<1x16x16xf32>
    %1 = vector.shape_cast %0 : vector<1x16x16xf32> to vector<16x16xf32>
    %2 = vector.extract_strided_slice %1 {offsets = [0, 0], sizes = [16, 12], strides = [1, 1]} : vector<16x16xf32> to vector<16x12xf32>
    %cst = arith.constant 6.250000e-02 : f32
    %3 = vector.broadcast %cst : f32 to vector<16x12xf32>
    %4 = arith.mulf %3, %2 : vector<16x12xf32>
    %5 = vector.extract_strided_slice %1 {offsets = [0, 1], sizes = [16, 12], strides = [1, 1]} : vector<16x16xf32> to vector<16x12xf32>
    %cst_2 = arith.constant 2.500000e-01 : f32
    %6 = vector.broadcast %cst_2 : f32 to vector<16x12xf32>
    %7 = arith.mulf %6, %5 : vector<16x12xf32>
    %8 = arith.addf %4, %7 : vector<16x12xf32>
    %9 = vector.extract_strided_slice %1 {offsets = [0, 2], sizes = [16, 12], strides = [1, 1]} : vector<16x16xf32> to vector<16x12xf32>
    %cst_3 = arith.constant 3.750000e-01 : f32
    %10 = vector.broadcast %cst_3 : f32 to vector<16x12xf32>
    %11 = arith.mulf %10, %9 : vector<16x12xf32>
    %12 = arith.addf %8, %11 : vector<16x12xf32>
    %13 = vector.extract_strided_slice %1 {offsets = [0, 3], sizes = [16, 12], strides = [1, 1]} : vector<16x16xf32> to vector<16x12xf32>
    %cst_4 = arith.constant 2.500000e-01 : f32
    %14 = vector.broadcast %cst_4 : f32 to vector<16x12xf32>
    %15 = arith.mulf %14, %13 : vector<16x12xf32>
    %16 = arith.addf %12, %15 : vector<16x12xf32>
    %17 = vector.extract_strided_slice %1 {offsets = [0, 4], sizes = [16, 12], strides = [1, 1]} : vector<16x16xf32> to vector<16x12xf32>
    %cst_5 = arith.constant 6.250000e-02 : f32
    %18 = vector.broadcast %cst_5 : f32 to vector<16x12xf32>
    %19 = arith.mulf %18, %17 : vector<16x12xf32>
    %20 = arith.addf %16, %19 : vector<16x12xf32>
    %21 = vector.extract_strided_slice %20 {offsets = [0, 0], sizes = [12, 12], strides = [1, 1]} : vector<16x12xf32> to vector<12x12xf32>
    %cst_6 = arith.constant 6.250000e-02 : f32
    %22 = vector.broadcast %cst_6 : f32 to vector<12x12xf32>
    %23 = arith.mulf %22, %21 : vector<12x12xf32>
    %24 = vector.extract_strided_slice %20 {offsets = [1, 0], sizes = [12, 12], strides = [1, 1]} : vector<16x12xf32> to vector<12x12xf32>
    %cst_7 = arith.constant 2.500000e-01 : f32
    %25 = vector.broadcast %cst_7 : f32 to vector<12x12xf32>
    %26 = arith.mulf %25, %24 : vector<12x12xf32>
    %27 = arith.addf %23, %26 : vector<12x12xf32>
    %28 = vector.extract_strided_slice %20 {offsets = [2, 0], sizes = [12, 12], strides = [1, 1]} : vector<16x12xf32> to vector<12x12xf32>
    %cst_8 = arith.constant 3.750000e-01 : f32
    %29 = vector.broadcast %cst_8 : f32 to vector<12x12xf32>
    %30 = arith.mulf %29, %28 : vector<12x12xf32>
    %31 = arith.addf %27, %30 : vector<12x12xf32>
    %32 = vector.extract_strided_slice %20 {offsets = [3, 0], sizes = [12, 12], strides = [1, 1]} : vector<16x12xf32> to vector<12x12xf32>
    %cst_9 = arith.constant 2.500000e-01 : f32
    %33 = vector.broadcast %cst_9 : f32 to vector<12x12xf32>
    %34 = arith.mulf %33, %32 : vector<12x12xf32>
    %35 = arith.addf %31, %34 : vector<12x12xf32>
    %36 = vector.extract_strided_slice %20 {offsets = [4, 0], sizes = [12, 12], strides = [1, 1]} : vector<16x12xf32> to vector<12x12xf32>
    %cst_10 = arith.constant 6.250000e-02 : f32
    %37 = vector.broadcast %cst_10 : f32 to vector<12x12xf32>
    %38 = arith.mulf %37, %36 : vector<12x12xf32>
    %39 = arith.addf %35, %38 : vector<12x12xf32>
    %c0_11 = arith.constant 0 : index
    %c0_12 = arith.constant 0 : index
    %c0_13 = arith.constant 0 : index
    %40 = vector.load %arg2[%c0_11, %c0_12, %c0_13] : memref<1x12x12xf32, #tpu.memory_space<vmem>>, vector<1x12x12xf32>
    %41 = vector.shape_cast %40 : vector<1x12x12xf32> to vector<12x12xf32>
    %42 = vector.shape_cast %39 : vector<12x12xf32> to vector<1x12x12xf32>
    tpu.vector_store %arg2[%c0_11, %c0_12, %c0_13], %42 {strides = array<i32>} : memref<1x12x12xf32, #tpu.memory_space<vmem>>, vector<1x12x12xf32>,
    return
  }
  func.func @transform_0(%arg0: i32) -> (i32, i32, i32) {
    %c0_i32 = arith.constant 0 : i32
    %c0_i32_0 = arith.constant 0 : i32
    %c0_i32_1 = arith.constant 0 : i32
    return %arg0, %c0_i32, %c0_i32_0 : i32, i32, i32
  }
  func.func @transform_1(%arg0: i32) -> (i32, i32, i32) {
    %c0_i32 = arith.constant 0 : i32
    %c0_i32_0 = arith.constant 0 : i32
    %c0_i32_1 = arith.constant 0 : i32
    return %arg0, %c0_i32, %c0_i32_0 : i32, i32, i32
  }
}

module attributes {stable_mosaic.version = 11 : i64} {
  func.func @_csf_kernel(%arg0: i32, %arg1: memref<2x3x36xf32, #tpu.memory_space<vmem>>, %arg2: memref<2x3x36xf32, #tpu.memory_space<vmem>>) attributes {dimension_semantics = [#tpu.dimension_semantics<arbitrary>], iteration_bounds = array<i64: 1>, scalar_prefetch = 0 : i64, scratch_operands = 0 : i64, tpu.core_type = #tpu.core_type<tc>, window_params = [{pipeline_mode = #tpu.pipeline_mode<synchronous>, transform_indices = @transform_0, window_bounds = array<i64: 2, 3, 36>}, {pipeline_mode = #tpu.pipeline_mode<synchronous>, transform_indices = @transform_1, window_bounds = array<i64: 2, 3, 36>}]} {
    %c0 = arith.constant 0 : index
    %c0_0 = arith.constant 0 : index
    %c0_1 = arith.constant 0 : index
    %0 = vector.load %arg1[%c0, %c0_0, %c0_1] : memref<2x3x36xf32, #tpu.memory_space<vmem>>, vector<2x3x36xf32>
    %cst = arith.constant 4.045000e-02 : f32
    %1 = vector.broadcast %cst : f32 to vector<2x3x36xf32>
    %2 = arith.cmpf ogt, %0, %1 : vector<2x3x36xf32>
    %cst_2 = arith.constant 4.045000e-02 : f32
    %3 = vector.broadcast %cst_2 : f32 to vector<2x3x36xf32>
    %4 = arith.maximumf %0, %3 : vector<2x3x36xf32>
    %cst_3 = arith.constant 5.500000e-02 : f32
    %5 = vector.broadcast %cst_3 : f32 to vector<2x3x36xf32>
    %6 = arith.addf %4, %5 : vector<2x3x36xf32>
    %cst_4 = arith.constant 1.055000e+00 : f32
    %7 = vector.broadcast %cst_4 : f32 to vector<2x3x36xf32>
    %8 = arith.divf %6, %7 : vector<2x3x36xf32>
    %9 = math.log %8 : vector<2x3x36xf32>
    %cst_5 = arith.constant 2.400000e+00 : f32
    %10 = vector.broadcast %cst_5 : f32 to vector<2x3x36xf32>
    %11 = arith.mulf %10, %9 : vector<2x3x36xf32>
    %12 = math.exp %11 : vector<2x3x36xf32>
    %cst_6 = arith.constant 1.292000e+01 : f32
    %13 = vector.broadcast %cst_6 : f32 to vector<2x3x36xf32>
    %14 = arith.divf %0, %13 : vector<2x3x36xf32>
    %15 = arith.select %2, %12, %14 : vector<2x3x36xi1>, vector<2x3x36xf32>
    %16 = vector.extract_strided_slice %15 {offsets = [0, 0, 0], sizes = [2, 1, 36], strides = [1, 1, 1]} : vector<2x3x36xf32> to vector<2x1x36xf32>
    %17 = vector.extract_strided_slice %15 {offsets = [0, 1, 0], sizes = [2, 1, 36], strides = [1, 1, 1]} : vector<2x3x36xf32> to vector<2x1x36xf32>
    %18 = vector.extract_strided_slice %15 {offsets = [0, 2, 0], sizes = [2, 1, 36], strides = [1, 1, 1]} : vector<2x3x36xf32> to vector<2x1x36xf32>
    %cst_7 = arith.constant 0.412386566 : f32
    %19 = vector.broadcast %cst_7 : f32 to vector<2x1x36xf32>
    %20 = arith.mulf %19, %16 : vector<2x1x36xf32>
    %cst_8 = arith.constant 0.35759148 : f32
    %21 = vector.broadcast %cst_8 : f32 to vector<2x1x36xf32>
    %22 = arith.mulf %21, %17 : vector<2x1x36xf32>
    %23 = arith.addf %20, %22 : vector<2x1x36xf32>
    %cst_9 = arith.constant 0.180450484 : f32
    %24 = vector.broadcast %cst_9 : f32 to vector<2x1x36xf32>
    %25 = arith.mulf %24, %18 : vector<2x1x36xf32>
    %26 = arith.addf %23, %25 : vector<2x1x36xf32>
    %cst_10 = arith.constant 1.05215693 : f32
    %27 = vector.broadcast %cst_10 : f32 to vector<2x1x36xf32>
    %28 = arith.mulf %26, %27 : vector<2x1x36xf32>
    %cst_11 = arith.constant 0.212636828 : f32
    %29 = vector.broadcast %cst_11 : f32 to vector<2x1x36xf32>
    %30 = arith.mulf %29, %16 : vector<2x1x36xf32>
    %cst_12 = arith.constant 0.71518296 : f32
    %31 = vector.broadcast %cst_12 : f32 to vector<2x1x36xf32>
    %32 = arith.mulf %31, %17 : vector<2x1x36xf32>
    %33 = arith.addf %30, %32 : vector<2x1x36xf32>
    %cst_13 = arith.constant 7.218020e-02 : f32
    %34 = vector.broadcast %cst_13 : f32 to vector<2x1x36xf32>
    %35 = arith.mulf %34, %18 : vector<2x1x36xf32>
    %36 = arith.addf %33, %35 : vector<2x1x36xf32>
    %cst_14 = arith.constant 1.000000e+00 : f32
    %37 = vector.broadcast %cst_14 : f32 to vector<2x1x36xf32>
    %38 = arith.mulf %36, %37 : vector<2x1x36xf32>
    %cst_15 = arith.constant 0.0193306208 : f32
    %39 = vector.broadcast %cst_15 : f32 to vector<2x1x36xf32>
    %40 = arith.mulf %39, %16 : vector<2x1x36xf32>
    %cst_16 = arith.constant 0.11919716 : f32
    %41 = vector.broadcast %cst_16 : f32 to vector<2x1x36xf32>
    %42 = arith.mulf %41, %17 : vector<2x1x36xf32>
    %43 = arith.addf %40, %42 : vector<2x1x36xf32>
    %cst_17 = arith.constant 0.950372576 : f32
    %44 = vector.broadcast %cst_17 : f32 to vector<2x1x36xf32>
    %45 = arith.mulf %44, %18 : vector<2x1x36xf32>
    %46 = arith.addf %43, %45 : vector<2x1x36xf32>
    %cst_18 = arith.constant 0.91835767 : f32
    %47 = vector.broadcast %cst_18 : f32 to vector<2x1x36xf32>
    %48 = arith.mulf %46, %47 : vector<2x1x36xf32>
    %cst_19 = arith.constant 0.00885645207 : f32
    %49 = vector.broadcast %cst_19 : f32 to vector<2x1x36xf32>
    %50 = arith.maximumf %28, %49 : vector<2x1x36xf32>
    %51 = math.log %50 : vector<2x1x36xf32>
    %cst_20 = arith.constant 0.333333343 : f32
    %52 = vector.broadcast %cst_20 : f32 to vector<2x1x36xf32>
    %53 = arith.mulf %52, %51 : vector<2x1x36xf32>
    %54 = math.exp %53 : vector<2x1x36xf32>
    %cst_21 = arith.constant 0.00885645207 : f32
    %55 = vector.broadcast %cst_21 : f32 to vector<2x1x36xf32>
    %56 = arith.cmpf ogt, %28, %55 : vector<2x1x36xf32>
    %cst_22 = arith.constant 7.7870369 : f32
    %57 = vector.broadcast %cst_22 : f32 to vector<2x1x36xf32>
    %58 = arith.mulf %57, %28 : vector<2x1x36xf32>
    %cst_23 = arith.constant 0.137931034 : f32
    %59 = vector.broadcast %cst_23 : f32 to vector<2x1x36xf32>
    %60 = arith.addf %58, %59 : vector<2x1x36xf32>
    %61 = arith.select %56, %54, %60 : vector<2x1x36xi1>, vector<2x1x36xf32>
    %cst_24 = arith.constant 0.00885645207 : f32
    %62 = vector.broadcast %cst_24 : f32 to vector<2x1x36xf32>
    %63 = arith.maximumf %38, %62 : vector<2x1x36xf32>
    %64 = math.log %63 : vector<2x1x36xf32>
    %cst_25 = arith.constant 0.333333343 : f32
    %65 = vector.broadcast %cst_25 : f32 to vector<2x1x36xf32>
    %66 = arith.mulf %65, %64 : vector<2x1x36xf32>
    %67 = math.exp %66 : vector<2x1x36xf32>
    %cst_26 = arith.constant 0.00885645207 : f32
    %68 = vector.broadcast %cst_26 : f32 to vector<2x1x36xf32>
    %69 = arith.cmpf ogt, %38, %68 : vector<2x1x36xf32>
    %cst_27 = arith.constant 7.7870369 : f32
    %70 = vector.broadcast %cst_27 : f32 to vector<2x1x36xf32>
    %71 = arith.mulf %70, %38 : vector<2x1x36xf32>
    %cst_28 = arith.constant 0.137931034 : f32
    %72 = vector.broadcast %cst_28 : f32 to vector<2x1x36xf32>
    %73 = arith.addf %71, %72 : vector<2x1x36xf32>
    %74 = arith.select %69, %67, %73 : vector<2x1x36xi1>, vector<2x1x36xf32>
    %cst_29 = arith.constant 0.00885645207 : f32
    %75 = vector.broadcast %cst_29 : f32 to vector<2x1x36xf32>
    %76 = arith.maximumf %48, %75 : vector<2x1x36xf32>
    %77 = math.log %76 : vector<2x1x36xf32>
    %cst_30 = arith.constant 0.333333343 : f32
    %78 = vector.broadcast %cst_30 : f32 to vector<2x1x36xf32>
    %79 = arith.mulf %78, %77 : vector<2x1x36xf32>
    %80 = math.exp %79 : vector<2x1x36xf32>
    %cst_31 = arith.constant 0.00885645207 : f32
    %81 = vector.broadcast %cst_31 : f32 to vector<2x1x36xf32>
    %82 = arith.cmpf ogt, %48, %81 : vector<2x1x36xf32>
    %cst_32 = arith.constant 7.7870369 : f32
    %83 = vector.broadcast %cst_32 : f32 to vector<2x1x36xf32>
    %84 = arith.mulf %83, %48 : vector<2x1x36xf32>
    %cst_33 = arith.constant 0.137931034 : f32
    %85 = vector.broadcast %cst_33 : f32 to vector<2x1x36xf32>
    %86 = arith.addf %84, %85 : vector<2x1x36xf32>
    %87 = arith.select %82, %80, %86 : vector<2x1x36xi1>, vector<2x1x36xf32>
    %cst_34 = arith.constant 1.160000e+02 : f32
    %88 = vector.broadcast %cst_34 : f32 to vector<2x1x36xf32>
    %89 = arith.mulf %88, %74 : vector<2x1x36xf32>
    %cst_35 = arith.constant 1.600000e+01 : f32
    %90 = vector.broadcast %cst_35 : f32 to vector<2x1x36xf32>
    %91 = arith.subf %89, %90 : vector<2x1x36xf32>
    %c0_36 = arith.constant 0 : index
    %c0_37 = arith.constant 0 : index
    %c0_38 = arith.constant 0 : index
    %92 = vector.load %arg2[%c0_36, %c0_37, %c0_38] : memref<2x3x36xf32, #tpu.memory_space<vmem>>, vector<2x1x36xf32>
    tpu.vector_store %arg2[%c0_36, %c0_37, %c0_38], %91 {strides = array<i32>} : memref<2x3x36xf32, #tpu.memory_space<vmem>>, vector<2x1x36xf32>,
    %93 = arith.subf %61, %74 : vector<2x1x36xf32>
    %cst_39 = arith.constant 5.000000e+02 : f32
    %94 = vector.broadcast %cst_39 : f32 to vector<2x1x36xf32>
    %95 = arith.mulf %94, %93 : vector<2x1x36xf32>
    %c0_40 = arith.constant 0 : index
    %c1 = arith.constant 1 : index
    %c0_41 = arith.constant 0 : index
    %96 = vector.load %arg2[%c0_40, %c1, %c0_41] : memref<2x3x36xf32, #tpu.memory_space<vmem>>, vector<2x1x36xf32>
    tpu.vector_store %arg2[%c0_40, %c1, %c0_41], %95 {strides = array<i32>} : memref<2x3x36xf32, #tpu.memory_space<vmem>>, vector<2x1x36xf32>,
    %97 = arith.subf %74, %87 : vector<2x1x36xf32>
    %cst_42 = arith.constant 2.000000e+02 : f32
    %98 = vector.broadcast %cst_42 : f32 to vector<2x1x36xf32>
    %99 = arith.mulf %98, %97 : vector<2x1x36xf32>
    %c0_43 = arith.constant 0 : index
    %c2 = arith.constant 2 : index
    %c0_44 = arith.constant 0 : index
    %100 = vector.load %arg2[%c0_43, %c2, %c0_44] : memref<2x3x36xf32, #tpu.memory_space<vmem>>, vector<2x1x36xf32>
    tpu.vector_store %arg2[%c0_43, %c2, %c0_44], %99 {strides = array<i32>} : memref<2x3x36xf32, #tpu.memory_space<vmem>>, vector<2x1x36xf32>,
    return
  }
  func.func @transform_0(%arg0: i32) -> (i32, i32, i32) {
    %c0_i32 = arith.constant 0 : i32
    %c0_i32_0 = arith.constant 0 : i32
    %c0_i32_1 = arith.constant 0 : i32
    %c0_i32_2 = arith.constant 0 : i32
    return %c0_i32, %c0_i32_0, %c0_i32_1 : i32, i32, i32
  }
  func.func @transform_1(%arg0: i32) -> (i32, i32, i32) {
    %c0_i32 = arith.constant 0 : i32
    %c0_i32_0 = arith.constant 0 : i32
    %c0_i32_1 = arith.constant 0 : i32
    %c0_i32_2 = arith.constant 0 : i32
    return %c0_i32, %c0_i32_0, %c0_i32_1 : i32, i32, i32
  }
}

module attributes {stable_mosaic.version = 11 : i64} {
  func.func @_proj_matmul_kernel(%arg0: i32, %arg1: memref<24x384xbf16, #tpu.memory_space<vmem>>, %arg2: memref<384x128xbf16, #tpu.memory_space<vmem>>, %arg3: memref<24x128xf32, #tpu.memory_space<vmem>>) attributes {dimension_semantics = [#tpu.dimension_semantics<parallel>], iteration_bounds = array<i64: 2>, scalar_prefetch = 0 : i64, scratch_operands = 0 : i64, tpu.core_type = #tpu.core_type<tc>, window_params = [{pipeline_mode = #tpu.pipeline_mode<synchronous>, transform_indices = @transform_0, window_bounds = array<i64: 24, 384>}, {transform_indices = @transform_1, window_bounds = array<i64: 384, 128>}, {transform_indices = @transform_2, window_bounds = array<i64: 24, 128>}]} {
    %c0 = arith.constant 0 : index
    %c0_0 = arith.constant 0 : index
    %0 = vector.load %arg1[%c0, %c0_0] : memref<24x384xbf16, #tpu.memory_space<vmem>>, vector<24x384xbf16>
    %c0_1 = arith.constant 0 : index
    %c0_2 = arith.constant 0 : index
    %1 = vector.load %arg2[%c0_1, %c0_2] : memref<384x128xbf16, #tpu.memory_space<vmem>>, vector<384x128xbf16>
    %cst = arith.constant dense<0.000000e+00> : vector<24x128xf32>
    %2 = tpu.matmul %0, %1, %cst {dimension_numbers = #tpu.dot_dimension_numbers<[1], [0], [0], [1], [0, 0, 1, 1], [], []>} : vector<24x384xbf16>, vector<384x128xbf16>, vector<24x128xf32> -> vector<24x128xf32>
    %c0_3 = arith.constant 0 : index
    %c0_4 = arith.constant 0 : index
    %3 = vector.load %arg3[%c0_3, %c0_4] : memref<24x128xf32, #tpu.memory_space<vmem>>, vector<24x128xf32>
    tpu.vector_store %arg3[%c0_3, %c0_4], %2 {strides = array<i32>} : memref<24x128xf32, #tpu.memory_space<vmem>>, vector<24x128xf32>,
    return
  }
  func.func @transform_0(%arg0: i32) -> (i32, i32) {
    %c0_i32 = arith.constant 0 : i32
    %c0_i32_0 = arith.constant 0 : i32
    %c0_i32_1 = arith.constant 0 : i32
    return %c0_i32, %c0_i32_0 : i32, i32
  }
  func.func @transform_1(%arg0: i32) -> (i32, i32) {
    %c0_i32 = arith.constant 0 : i32
    %c0_i32_0 = arith.constant 0 : i32
    return %c0_i32, %arg0 : i32, i32
  }
  func.func @transform_2(%arg0: i32) -> (i32, i32) {
    %c0_i32 = arith.constant 0 : i32
    %c0_i32_0 = arith.constant 0 : i32
    return %c0_i32, %arg0 : i32, i32
  }
}

module attributes {stable_mosaic.version = 11 : i64} {
  func.func @_swd_kernel(%arg0: i32, %arg1: memref<24x2x36xf32, #tpu.memory_space<vmem>>, %arg2: memref<24x2x36xf32, #tpu.memory_space<vmem>>, %arg3: memref<2x128xf32, #tpu.memory_space<vmem>>) attributes {dimension_semantics = [#tpu.dimension_semantics<arbitrary>], iteration_bounds = array<i64: 1>, scalar_prefetch = 0 : i64, scratch_operands = 0 : i64, tpu.core_type = #tpu.core_type<tc>, window_params = [{pipeline_mode = #tpu.pipeline_mode<synchronous>, transform_indices = @transform_0, window_bounds = array<i64: 24, 2, 36>}, {pipeline_mode = #tpu.pipeline_mode<synchronous>, transform_indices = @transform_1, window_bounds = array<i64: 24, 2, 36>}, {pipeline_mode = #tpu.pipeline_mode<synchronous>, transform_indices = @transform_2, window_bounds = array<i64: 2, 128>}]} {
    %c0 = arith.constant 0 : index
    %c0_0 = arith.constant 0 : index
    %c0_1 = arith.constant 0 : index
    %0 = vector.load %arg1[%c0, %c0_0, %c0_1] : memref<24x2x36xf32, #tpu.memory_space<vmem>>, vector<24x2x36xf32>
    %c0_2 = arith.constant 0 : index
    %c0_3 = arith.constant 0 : index
    %c0_4 = arith.constant 0 : index
    %1 = vector.load %arg2[%c0_2, %c0_3, %c0_4] : memref<24x2x36xf32, #tpu.memory_space<vmem>>, vector<24x2x36xf32>
    %2 = arith.subf %0, %1 : vector<24x2x36xf32>
    %3 = math.absf %2 : vector<24x2x36xf32>
    %cst = arith.constant dense<0.000000e+00> : vector<2x36xf32>
    %4 = vector.multi_reduction <add>, %3, %cst [0] : vector<24x2x36xf32> to vector<2x36xf32>
    %cst_5 = arith.constant dense<0.000000e+00> : vector<2xf32>
    %5 = vector.multi_reduction <add>, %4, %cst_5 [1] : vector<2x36xf32> to vector<2xf32>
    %6 = vector.shape_cast %5 : vector<2xf32> to vector<2x1xf32>
    %cst_6 = arith.constant 8.640000e+02 : f32
    %7 = vector.broadcast %cst_6 : f32 to vector<2x1xf32>
    %8 = arith.divf %6, %7 : vector<2x1xf32>
    %9 = vector.shape_cast %8 : vector<2x1xf32> to vector<2x1xf32>
    %10 = vector.broadcast %9 : vector<2x1xf32> to vector<2x128xf32>
    %c0_7 = arith.constant 0 : index
    %c0_8 = arith.constant 0 : index
    %11 = vector.load %arg3[%c0_7, %c0_8] : memref<2x128xf32, #tpu.memory_space<vmem>>, vector<2x128xf32>
    tpu.vector_store %arg3[%c0_7, %c0_8], %10 {strides = array<i32>} : memref<2x128xf32, #tpu.memory_space<vmem>>, vector<2x128xf32>,
    return
  }
  func.func @transform_0(%arg0: i32) -> (i32, i32, i32) {
    %c0_i32 = arith.constant 0 : i32
    %c0_i32_0 = arith.constant 0 : i32
    %c0_i32_1 = arith.constant 0 : i32
    %c0_i32_2 = arith.constant 0 : i32
    return %c0_i32, %c0_i32_0, %c0_i32_1 : i32, i32, i32
  }
  func.func @transform_1(%arg0: i32) -> (i32, i32, i32) {
    %c0_i32 = arith.constant 0 : i32
    %c0_i32_0 = arith.constant 0 : i32
    %c0_i32_1 = arith.constant 0 : i32
    %c0_i32_2 = arith.constant 0 : i32
    return %c0_i32, %c0_i32_0, %c0_i32_1 : i32, i32, i32
  }
  func.func @transform_2(%arg0: i32) -> (i32, i32) {
    %c0_i32 = arith.constant 0 : i32
    %c0_i32_0 = arith.constant 0 : i32
    %c0_i32_1 = arith.constant 0 : i32
    return %c0_i32, %c0_i32_0 : i32, i32
  }
}

</mosaic_0001>

<llo_original>
// kernel: msswd_loss_forward.13
$region0: #{msswd_loss_forward.13}
  #allocation0 [shape = 'u32[]', space=smem, size = 0x4, offset = 0x4, fixed_abs, tag = 'smem constant byte address 0x4 - core index']
  #allocation1 [shape = 'u32[144,128]{1,0:T(1,128)}', space=vmem, size = 0x12000, scoped, tag = 'internal scratch']
  %s0 = inlined_call_operand.vmem [shape: f32[6,28,28], index: 0, kind: input, shape index: {}]
  %s1 = inlined_call_operand.vmem [shape: f32[6,24,24], index: 1, kind: output, shape index: {}]
  %s2 = sld [smem:[#allocation0]]
  $region37: #{msswd_loss_forward.13} parent=0
    _
  %s4 = ssub.s32 1, %s2
  %s5 = scalar_select 0, %s4, %s2
  loop: start=0, step=1, limit=8
  $region2: #{msswd_loss_forward.13} parent=0 // loop_pre_header
    _
  $region3: #{msswd_loss_forward.13} parent=0 // loop_header
    %s7 = sphi 0, %s11
    %p8 = scmp.ge.s32.totalorder %s7, 8
    %s17 = sphi 0, %s19
    %s20 = sphi 0, %s17
    %s21 = sphi 0, %s20
    %s37 = sphi 0, %s21
    %s43 = sphi 0, %s45
    %s46 = sphi 0, %s43
    %s47 = sphi 0, %s46
    %s63 = sphi 0, %s47
  $region4: #{msswd_loss_forward.13} parent=0 // loop_header_branch
    %10 = sbr.rel (%p8) target = $region8
  $region5: #{msswd_loss_forward.13} parent=0 // loop_body
    %s12 = ssub.s32 %s7, 1
    %s13 = ssub.s32 %s7, 2
    %s14 = sadd.s32 %s7, 1
    %s15 = ssub.s32 %s7, %s14
    %p16 = scmp.eq.s32.totalorder %s15, 0
    %s18 = sadd.s32 %s17, 1
    %s19 = scalar_select %p16, %s17, %s18
    %p22 = pneg %p16
    %p23 = scmp.eq.s32.totalorder %s7, 5
    %p24 = por %p22, %p23
    %p25 = scmp.ne.s32.totalorder %s17, %s20
    %p26 = scmp.eq.s32.totalorder %s7, 0
    %p27 = por %p25, %p26
    %p28 = scmp.ne.s32.totalorder %s17, %s20
    %p29 = scmp.eq.s32.totalorder %s12, 5
    %p30 = por %p28, %p29
    %p31 = scmp.ne.s32.totalorder %s20, %s21
    %p32 = scmp.eq.s32.totalorder %s12, 0
    %p33 = por %p31, %p32
    %p34 = scmp.ne.s32.totalorder %s20, %s21
    %p35 = scmp.eq.s32.totalorder %s13, 5
    %p36 = por %p34, %p35
    %p38 = scmp.ne.s32.totalorder %s21, %s37
    %p39 = scmp.eq.s32.totalorder %s13, 0
    %p40 = por %p38, %p39
    %s41 = ssub.s32 %s7, %s14
    %p42 = scmp.eq.s32.totalorder %s41, 0
    %s44 = sadd.s32 %s43, 1
    %s45 = scalar_select %p42, %s43, %s44
    %p48 = pneg %p42
    %p49 = scmp.eq.s32.totalorder %s7, 5
    %p50 = por %p48, %p49
    %p51 = scmp.ne.s32.totalorder %s43, %s46
    %p52 = scmp.eq.s32.totalorder %s7, 0
    %p53 = por %p51, %p52
    %p54 = scmp.ne.s32.totalorder %s43, %s46
    %p55 = scmp.eq.s32.totalorder %s12, 5
    %p56 = por %p54, %p55
    %p57 = scmp.ne.s32.totalorder %s46, %s47
    %p58 = scmp.eq.s32.totalorder %s12, 0
    %p59 = por %p57, %p58
    %p60 = scmp.ne.s32.totalorder %s46, %s47
    %p61 = scmp.eq.s32.totalorder %s13, 5
    %p62 = por %p60, %p61
    %p64 = scmp.ne.s32.totalorder %s47, %s63
    %p65 = scmp.eq.s32.totalorder %s13, 0
    %p66 = por %p64, %p65
    %p67 = scmp.le.s32.totalorder 1, %s7
    %p68 = scmp.lt.s32.totalorder %s7, 7
    %p69 = pnand %p67, %p68
    %p70 = pneg %p69
    // Predicated region
    $region9: #{msswd_loss_forward.13} parent=5 // pred_check
      _
    $region10: #{msswd_loss_forward.13} parent=5 // pred_check_branch
      %72 = sbr.rel (%p69) target = $region12
    $region11: #{msswd_loss_forward.13} parent=5 // pred_region
      %s73 = ssub.s32 %s7, 1
    $region12: #{msswd_loss_forward.13} parent=5 // pred_fallthru
      _
    %p74 = scmp.lt.s32.totalorder %s7, 6
    // Predicated region
    $region13: #{msswd_loss_forward.13} parent=5 // pred_check
      %p75 = pneg %p74
    $region14: #{msswd_loss_forward.13} parent=5 // pred_check_branch
      %77 = sbr.rel (%p75) target = $region16
    $region15: #{msswd_loss_forward.13} parent=5 // pred_region
      // Predicated region
      $region17: #{msswd_loss_forward.13} parent=15 // pred_check
        %p78 = pneg %p27
      $region18: #{msswd_loss_forward.13} parent=15 // pred_check_branch
        %80 = sbr.rel (%p78) target = $region20
      $region19: #{msswd_loss_forward.13} parent=15 // pred_region
        %p81 = scmp.lt.s32.totalorder %s7, 5
        %s82 = scalar_select %p81, %s7, 5
        %s83 = smul.addr %s82, 4
        %s84 = smul.addr %s83, 8
        %s85 = scalar_lea.vmem %s0, %s84
      $region20: #{msswd_loss_forward.13} parent=15 // pred_fallthru
        _
    $region16: #{msswd_loss_forward.13} parent=5 // pred_fallthru
      _
    %p86 = scmp.le.s32.totalorder 1, %s7
    %p87 = scmp.lt.s32.totalorder %s7, 7
    %p88 = pnand %p86, %p87
    %p89 = pneg %p88
    // Predicated region
    $region21: #{msswd_loss_forward.13} parent=5 // pred_check
      _
    $region22: #{msswd_loss_forward.13} parent=5 // pred_check_branch
      %91 = sbr.rel (%p88) target = $region24
    $region23: #{msswd_loss_forward.13} parent=5 // pred_region
      %s92 = ssub.s32 %s7, 1
      %p93 = scmp.lt.s32.totalorder %s12, 5
      %s94 = scalar_select %p93, %s12, 5
      %s95 = smul.addr %s94, 4
      %s96 = smul.addr %s95, 8
      %s97 = scalar_lea.vmem %s0, %s96
      %p98 = pneg %p33
      %p99 = pneg %p30
      %p100 = pneg %p59
      %p101 = pneg %p56
      %p102 = scmp.lt.s32.totalorder %s12, 5
      %s103 = scalar_select %p102, %s12, 5
      %s104 = smul.addr %s103, 3
      %s105 = smul.addr %s104, 8
      %s106 = scalar_lea.vmem %s1, %s105
      %p107 = scmp.lt.s32.totalorder %s12, 5
      %s108 = scalar_select %p107, %s12, 5
      %s109 = smul.addr %s108, 4
      %s110 = smul.addr %s109, 8
      %s111 = scalar_lea.vmem %s0, %s110
      %p112 = scmp.lt.s32.totalorder %s12, 5
      %s113 = scalar_select %p112, %s12, 5
      %s114 = smul.addr %s113, 3
      %s115 = smul.addr %s114, 8
      %s116 = scalar_lea.vmem %s1, %s115
      %v117 = vld [vmem:[%s111] sm:$0xff]
      %v118 = vld [vmem:[%s111 + $0x8] sm:$0xff]
      %v119 = vld [vmem:[%s111 + $0x10] sm:$0xff]
      %v120 = vld [vmem:[%s111 + $0x18] sm:$0xf]
      %v121 = vmul.f32 %v117, 0.0625
      %v122 = vmul.f32 %v118, 0.0625
      %v123 = vmul.f32 %v119, 0.0625
      %v124 = vmul.f32 %v120, 0.0625
      %v125 = vmul.f32 %v117, 0.25
      %v126 = vmul.f32 %v118, 0.25
      %v127 = vmul.f32 %v119, 0.25
      %v128 = vmul.f32 %v120, 0.25
      %133 = vrot.lane.b32.xlu0 %v125, 127
      %v134 = vpop.permute.xlu0 %133
      %135 = vrot.lane.b32.xlu0 %v126, 127
      %v136 = vpop.permute.xlu0 %135
      %137 = vrot.lane.b32.xlu0 %v127, 127
      %v138 = vpop.permute.xlu0 %137
      %139 = vrot.lane.b32.xlu0 %v128, 127
      %v140 = vpop.permute.xlu0 %139
      %v145 = vadd.f32 %v121, %v134
      %v146 = vadd.f32 %v122, %v136
      %v147 = vadd.f32 %v123, %v138
      %v148 = vadd.f32 %v124, %v140
      %v149 = vmul.f32 %v117, 0.375
      %v150 = vmul.f32 %v118, 0.375
      %v151 = vmul.f32 %v119, 0.375
      %v152 = vmul.f32 %v120, 0.375
      %157 = vrot.lane.b32.xlu0 %v149, 126
      %v158 = vpop.permute.xlu0 %157
      %159 = vrot.lane.b32.xlu0 %v150, 126
      %v160 = vpop.permute.xlu0 %159
      %161 = vrot.lane.b32.xlu0 %v151, 126
      %v162 = vpop.permute.xlu0 %161
      %163 = vrot.lane.b32.xlu0 %v152, 126
      %v164 = vpop.permute.xlu0 %163
      %v169 = vadd.f32 %v145, %v158
      %v170 = vadd.f32 %v146, %v160
      %v171 = vadd.f32 %v147, %v162
      %v172 = vadd.f32 %v148, %v164
      %173 = vrot.lane.b32.xlu0 %v125, 125
      %v174 = vpop.permute.xlu0 %173
      %175 = vrot.lane.b32.xlu0 %v126, 125
      %v176 = vpop.permute.xlu0 %175
      %177 = vrot.lane.b32.xlu0 %v127, 125
      %v178 = vpop.permute.xlu0 %177
      %179 = vrot.lane.b32.xlu0 %v128, 125
      %v180 = vpop.permute.xlu0 %179
      %v185 = vadd.f32 %v169, %v174
      %v186 = vadd.f32 %v170, %v176
      %v187 = vadd.f32 %v171, %v178
      %v188 = vadd.f32 %v172, %v180
      %193 = vrot.lane.b32.xlu0 %v121, 124
      %v194 = vpop.permute.xlu0 %193
      %195 = vrot.lane.b32.xlu0 %v122, 124
      %v196 = vpop.permute.xlu0 %195
      %197 = vrot.lane.b32.xlu0 %v123, 124
      %v198 = vpop.permute.xlu0 %197
      %199 = vrot.lane.b32.xlu0 %v124, 124
      %v200 = vpop.permute.xlu0 %199
      %v205 = vadd.f32 %v185, %v194
      %v206 = vadd.f32 %v186, %v196
      %v207 = vadd.f32 %v187, %v198
      %v208 = vadd.f32 %v188, %v200
      %v209 = vmul.f32 %v205, 0.0625
      %v210 = vmul.f32 %v206, 0.0625
      %v211 = vmul.f32 %v207, 0.0625
      %v212 = vmul.f32 %v205, 0.25
      %v213 = vmul.f32 %v206, 0.25
      %v214 = vmul.f32 %v207, 0.25
      %v215 = vmul.f32 %v208, 0.25
      %vm220 = vcmask 1046528
      %v221 = vrot.slane %v212, 1
      %v222 = vrot.slane %v213, 1
      %v223 = vsel %vm220, %v221, %v222
      %v224 = vrot.slane %v214, 1
      %v225 = vsel %vm220, %v222, %v224
      %v226 = vrot.slane %v215, 1
      %v227 = vsel %vm220, %v224, %v226
      %v231 = vadd.f32 %v209, %v223
      %v232 = vadd.f32 %v210, %v225
      %v233 = vadd.f32 %v211, %v227
      %v234 = vmul.f32 %v205, 0.375
      %v235 = vmul.f32 %v206, 0.375
      %v236 = vmul.f32 %v207, 0.375
      %v237 = vmul.f32 %v208, 0.375
      %vm242 = vcmask 1045504
      %v243 = vrot.slane %v234, 2
      %v244 = vrot.slane %v235, 2
      %v245 = vsel %vm242, %v243, %v244
      %v246 = vrot.slane %v236, 2
      %v247 = vsel %vm242, %v244, %v246
      %v248 = vrot.slane %v237, 2
      %v249 = vsel %vm242, %v246, %v248
      %v253 = vadd.f32 %v231, %v245
      %v254 = vadd.f32 %v232, %v247
      %v255 = vadd.f32 %v233, %v249
      %vm256 = vcmask 1044480
      %v257 = vrot.slane %v212, 3
      %v258 = vrot.slane %v213, 3
      %v259 = vsel %vm256, %v257, %v258
      %v260 = vrot.slane %v214, 3
      %v261 = vsel %vm256, %v258, %v260
      %v262 = vrot.slane %v215, 3
      %v263 = vsel %vm256, %v260, %v262
      %v267 = vadd.f32 %v253, %v259
      %v268 = vadd.f32 %v254, %v261
      %v269 = vadd.f32 %v255, %v263
      %v270 = vmul.f32 %v208, 0.0625
      %vm275 = vcmask 1043456
      %v276 = vrot.slane %v209, 4
      %v277 = vrot.slane %v210, 4
      %v278 = vsel %vm275, %v276, %v277
      %v279 = vrot.slane %v211, 4
      %v280 = vsel %vm275, %v277, %v279
      %v281 = vrot.slane %v270, 4
      %v282 = vsel %vm275, %v279, %v281
      %v286 = vadd.f32 %v267, %v278
      %v287 = vadd.f32 %v268, %v280
      %v288 = vadd.f32 %v269, %v282
      %vm289 = vcmask 195584
      %290 = vst.msk [vmem:[%s116] sm:$0xff] %vm289, %v286
      %291 = vst.msk [vmem:[%s116 + $0x8] sm:$0xff] %vm289, %v287
      %292 = vst.msk [vmem:[%s116 + $0x10] sm:$0xff] %vm289, %v288
      %p293 = scmp.lt.s32.totalorder %s12, 5
      %s294 = scalar_select %p293, %s12, 5
      %s295 = smul.addr %s294, 3
      %s296 = smul.addr %s295, 8
      %s297 = scalar_lea.vmem %s1, %s296
      // Predicated region
      $region25: #{msswd_loss_forward.13} parent=23 // pred_check
        %p298 = pneg %p56
      $region26: #{msswd_loss_forward.13} parent=23 // pred_check_branch
        %300 = sbr.rel (%p298) target = $region28
      $region27: #{msswd_loss_forward.13} parent=23 // pred_region
        _
      $region28: #{msswd_loss_forward.13} parent=23 // pred_fallthru
        _
    $region24: #{msswd_loss_forward.13} parent=5 // pred_fallthru
      _
    %p301 = scmp.le.s32.totalorder 2, %s7
    // Predicated region
    $region29: #{msswd_loss_forward.13} parent=5 // pred_check
      %p302 = pneg %p301
    $region30: #{msswd_loss_forward.13} parent=5 // pred_check_branch
      %304 = sbr.rel (%p302) target = $region32
    $region31: #{msswd_loss_forward.13} parent=5 // pred_region
      %s305 = ssub.s32 %s7, 2
      // Predicated region
      $region33: #{msswd_loss_forward.13} parent=31 // pred_check
        %p306 = pneg %p62
      $region34: #{msswd_loss_forward.13} parent=31 // pred_check_branch
        %308 = sbr.rel (%p306) target = $region36
      $region35: #{msswd_loss_forward.13} parent=31 // pred_region
        %p309 = scmp.lt.s32.totalorder %s13, 5
        %s310 = scalar_select %p309, %s13, 5
        %s311 = smul.addr %s310, 3
        %s312 = smul.addr %s311, 8
        %s313 = scalar_lea.vmem %s1, %s312
      $region36: #{msswd_loss_forward.13} parent=31 // pred_fallthru
        _
    $region32: #{msswd_loss_forward.13} parent=5 // pred_fallthru
      _
  $region6: #{msswd_loss_forward.13} parent=0 // loop_footer
    %s11 = sadd.s32 1, %s7
  $region7: #{msswd_loss_forward.13} parent=0 // loop_footer_branch
    %6 = sbr.rel target = $region3
  $region8: #{msswd_loss_forward.13} parent=0 // loop_exit
    _

// kernel: msswd_loss_forward.14
$region0: #{msswd_loss_forward.14}
  #allocation0 [shape = 'u32[]', space=smem, size = 0x4, offset = 0x4, fixed_abs, tag = 'smem constant byte address 0x4 - core index']
  #allocation1 [shape = 'u32[144,128]{1,0:T(1,128)}', space=vmem, size = 0x12000, scoped, tag = 'internal scratch']
  %s0 = inlined_call_operand.vmem [shape: f32[6,16,16], index: 0, kind: input, shape index: {}]
  %s1 = inlined_call_operand.vmem [shape: f32[6,12,12], index: 1, kind: output, shape index: {}]
  %s2 = sld [smem:[#allocation0]]
  $region37: #{msswd_loss_forward.14} parent=0
    _
  %s4 = ssub.s32 1, %s2
  %s5 = scalar_select 0, %s4, %s2
  loop: start=0, step=1, limit=8
  $region2: #{msswd_loss_forward.14} parent=0 // loop_pre_header
    _
  $region3: #{msswd_loss_forward.14} parent=0 // loop_header
    %s7 = sphi 0, %s11
    %p8 = scmp.ge.s32.totalorder %s7, 8
    %s17 = sphi 0, %s19
    %s20 = sphi 0, %s17
    %s21 = sphi 0, %s20
    %s37 = sphi 0, %s21
    %s43 = sphi 0, %s45
    %s46 = sphi 0, %s43
    %s47 = sphi 0, %s46
    %s63 = sphi 0, %s47
  $region4: #{msswd_loss_forward.14} parent=0 // loop_header_branch
    %10 = sbr.rel (%p8) target = $region8
  $region5: #{msswd_loss_forward.14} parent=0 // loop_body
    %s12 = ssub.s32 %s7, 1
    %s13 = ssub.s32 %s7, 2
    %s14 = sadd.s32 %s7, 1
    %s15 = ssub.s32 %s7, %s14
    %p16 = scmp.eq.s32.totalorder %s15, 0
    %s18 = sadd.s32 %s17, 1
    %s19 = scalar_select %p16, %s17, %s18
    %p22 = pneg %p16
    %p23 = scmp.eq.s32.totalorder %s7, 5
    %p24 = por %p22, %p23
    %p25 = scmp.ne.s32.totalorder %s17, %s20
    %p26 = scmp.eq.s32.totalorder %s7, 0
    %p27 = por %p25, %p26
    %p28 = scmp.ne.s32.totalorder %s17, %s20
    %p29 = scmp.eq.s32.totalorder %s12, 5
    %p30 = por %p28, %p29
    %p31 = scmp.ne.s32.totalorder %s20, %s21
    %p32 = scmp.eq.s32.totalorder %s12, 0
    %p33 = por %p31, %p32
    %p34 = scmp.ne.s32.totalorder %s20, %s21
    %p35 = scmp.eq.s32.totalorder %s13, 5
    %p36 = por %p34, %p35
    %p38 = scmp.ne.s32.totalorder %s21, %s37
    %p39 = scmp.eq.s32.totalorder %s13, 0
    %p40 = por %p38, %p39
    %s41 = ssub.s32 %s7, %s14
    %p42 = scmp.eq.s32.totalorder %s41, 0
    %s44 = sadd.s32 %s43, 1
    %s45 = scalar_select %p42, %s43, %s44
    %p48 = pneg %p42
    %p49 = scmp.eq.s32.totalorder %s7, 5
    %p50 = por %p48, %p49
    %p51 = scmp.ne.s32.totalorder %s43, %s46
    %p52 = scmp.eq.s32.totalorder %s7, 0
    %p53 = por %p51, %p52
    %p54 = scmp.ne.s32.totalorder %s43, %s46
    %p55 = scmp.eq.s32.totalorder %s12, 5
    %p56 = por %p54, %p55
    %p57 = scmp.ne.s32.totalorder %s46, %s47
    %p58 = scmp.eq.s32.totalorder %s12, 0
    %p59 = por %p57, %p58
    %p60 = scmp.ne.s32.totalorder %s46, %s47
    %p61 = scmp.eq.s32.totalorder %s13, 5
    %p62 = por %p60, %p61
    %p64 = scmp.ne.s32.totalorder %s47, %s63
    %p65 = scmp.eq.s32.totalorder %s13, 0
    %p66 = por %p64, %p65
    %p67 = scmp.le.s32.totalorder 1, %s7
    %p68 = scmp.lt.s32.totalorder %s7, 7
    %p69 = pnand %p67, %p68
    %p70 = pneg %p69
    // Predicated region
    $region9: #{msswd_loss_forward.14} parent=5 // pred_check
      _
    $region10: #{msswd_loss_forward.14} parent=5 // pred_check_branch
      %72 = sbr.rel (%p69) target = $region12
    $region11: #{msswd_loss_forward.14} parent=5 // pred_region
      %s73 = ssub.s32 %s7, 1
    $region12: #{msswd_loss_forward.14} parent=5 // pred_fallthru
      _
    %p74 = scmp.lt.s32.totalorder %s7, 6
    // Predicated region
    $region13: #{msswd_loss_forward.14} parent=5 // pred_check
      %p75 = pneg %p74
    $region14: #{msswd_loss_forward.14} parent=5 // pred_check_branch
      %77 = sbr.rel (%p75) target = $region16
    $region15: #{msswd_loss_forward.14} parent=5 // pred_region
      // Predicated region
      $region17: #{msswd_loss_forward.14} parent=15 // pred_check
        %p78 = pneg %p27
      $region18: #{msswd_loss_forward.14} parent=15 // pred_check_branch
        %80 = sbr.rel (%p78) target = $region20
      $region19: #{msswd_loss_forward.14} parent=15 // pred_region
        %p81 = scmp.lt.s32.totalorder %s7, 5
        %s82 = scalar_select %p81, %s7, 5
        %s83 = smul.addr %s82, 2
        %s84 = smul.addr %s83, 8
        %s85 = scalar_lea.vmem %s0, %s84
      $region20: #{msswd_loss_forward.14} parent=15 // pred_fallthru
        _
    $region16: #{msswd_loss_forward.14} parent=5 // pred_fallthru
      _
    %p86 = scmp.le.s32.totalorder 1, %s7
    %p87 = scmp.lt.s32.totalorder %s7, 7
    %p88 = pnand %p86, %p87
    %p89 = pneg %p88
    // Predicated region
    $region21: #{msswd_loss_forward.14} parent=5 // pred_check
      _
    $region22: #{msswd_loss_forward.14} parent=5 // pred_check_branch
      %91 = sbr.rel (%p88) target = $region24
    $region23: #{msswd_loss_forward.14} parent=5 // pred_region
      %s92 = ssub.s32 %s7, 1
      %p93 = scmp.lt.s32.totalorder %s12, 5
      %s94 = scalar_select %p93, %s12, 5
      %s95 = smul.addr %s94, 2
      %s96 = smul.addr %s95, 8
      %s97 = scalar_lea.vmem %s0, %s96
      %p98 = pneg %p33
      %p99 = pneg %p30
      %p100 = pneg %p59
      %p101 = pneg %p56
      %p102 = scmp.lt.s32.totalorder %s12, 5
      %s103 = scalar_select %p102, %s12, 5
      %s104 = smul.addr %s103, 2
      %s105 = smul.addr %s104, 8
      %s106 = scalar_lea.vmem %s1, %s105
      %p107 = scmp.lt.s32.totalorder %s12, 5
      %s108 = scalar_select %p107, %s12, 5
      %s109 = smul.addr %s108, 2
      %s110 = smul.addr %s109, 8
      %s111 = scalar_lea.vmem %s0, %s110
      %p112 = scmp.lt.s32.totalorder %s12, 5
      %s113 = scalar_select %p112, %s12, 5
      %s114 = smul.addr %s113, 2
      %s115 = smul.addr %s114, 8
      %s116 = scalar_lea.vmem %s1, %s115
      %v117 = vld [vmem:[%s111] sm:$0xff]
      %v118 = vld [vmem:[%s111 + $0x8] sm:$0xff]
      %v119 = vmul.f32 %v117, 0.0625
      %v120 = vmul.f32 %v118, 0.0625
      %v121 = vmul.f32 %v117, 0.25
      %v122 = vmul.f32 %v118, 0.25
      %125 = vrot.lane.b32.xlu0 %v121, 127
      %v126 = vpop.permute.xlu0 %125
      %127 = vrot.lane.b32.xlu0 %v122, 127
      %v128 = vpop.permute.xlu0 %127
      %v131 = vadd.f32 %v119, %v126
      %v132 = vadd.f32 %v120, %v128
      %v133 = vmul.f32 %v117, 0.375
      %v134 = vmul.f32 %v118, 0.375
      %137 = vrot.lane.b32.xlu0 %v133, 126
      %v138 = vpop.permute.xlu0 %137
      %139 = vrot.lane.b32.xlu0 %v134, 126
      %v140 = vpop.permute.xlu0 %139
      %v143 = vadd.f32 %v131, %v138
      %v144 = vadd.f32 %v132, %v140
      %145 = vrot.lane.b32.xlu0 %v121, 125
      %v146 = vpop.permute.xlu0 %145
      %147 = vrot.lane.b32.xlu0 %v122, 125
      %v148 = vpop.permute.xlu0 %147
      %v151 = vadd.f32 %v143, %v146
      %v152 = vadd.f32 %v144, %v148
      %155 = vrot.lane.b32.xlu0 %v119, 124
      %v156 = vpop.permute.xlu0 %155
      %157 = vrot.lane.b32.xlu0 %v120, 124
      %v158 = vpop.permute.xlu0 %157
      %v161 = vadd.f32 %v151, %v156
      %v162 = vadd.f32 %v152, %v158
      %v163 = vmul.f32 %v161, 0.0625
      %v164 = vmul.f32 %v162, 0.0625
      %v165 = vmul.f32 %v161, 0.25
      %v166 = vmul.f32 %v162, 0.25
      %vm169 = vcmask 1046528
      %v170 = vrot.slane %v165, 1
      %v171 = vrot.slane %v166, 1
      %v172 = vsel %vm169, %v170, %v171
      %v175 = vadd.f32 %v163, %v172
      %v176 = vadd.f32 %v164, %v171
      %v177 = vmul.f32 %v161, 0.375
      %v178 = vmul.f32 %v162, 0.375
      %vm181 = vcmask 1045504
      %v182 = vrot.slane %v177, 2
      %v183 = vrot.slane %v178, 2
      %v184 = vsel %vm181, %v182, %v183
      %v187 = vadd.f32 %v175, %v184
      %v188 = vadd.f32 %v176, %v183
      %vm189 = vcmask 1044480
      %v190 = vrot.slane %v165, 3
      %v191 = vrot.slane %v166, 3
      %v192 = vsel %vm189, %v190, %v191
      %v195 = vadd.f32 %v187, %v192
      %v196 = vadd.f32 %v188, %v191
      %vm199 = vcmask 1043456
      %v200 = vrot.slane %v163, 4
      %v201 = vrot.slane %v164, 4
      %v202 = vsel %vm199, %v200, %v201
      %v205 = vadd.f32 %v195, %v202
      %v206 = vadd.f32 %v196, %v201
      %vm207 = vcmask 97280
      %208 = vst.msk [vmem:[%s116] sm:$0xff] %vm207, %v205
      %vm209 = vcmask 93184
      %210 = vst.msk [vmem:[%s116 + $0x8] sm:$0xf] %vm209, %v206
      %p211 = scmp.lt.s32.totalorder %s12, 5
      %s212 = scalar_select %p211, %s12, 5
      %s213 = smul.addr %s212, 2
      %s214 = smul.addr %s213, 8
      %s215 = scalar_lea.vmem %s1, %s214
      // Predicated region
      $region25: #{msswd_loss_forward.14} parent=23 // pred_check
        %p216 = pneg %p56
      $region26: #{msswd_loss_forward.14} parent=23 // pred_check_branch
        %218 = sbr.rel (%p216) target = $region28
      $region27: #{msswd_loss_forward.14} parent=23 // pred_region
        _
      $region28: #{msswd_loss_forward.14} parent=23 // pred_fallthru
        _
    $region24: #{msswd_loss_forward.14} parent=5 // pred_fallthru
      _
    %p219 = scmp.le.s32.totalorder 2, %s7
    // Predicated region
    $region29: #{msswd_loss_forward.14} parent=5 // pred_check
      %p220 = pneg %p219
    $region30: #{msswd_loss_forward.14} parent=5 // pred_check_branch
      %222 = sbr.rel (%p220) target = $region32
    $region31: #{msswd_loss_forward.14} parent=5 // pred_region
      %s223 = ssub.s32 %s7, 2
      // Predicated region
      $region33: #{msswd_loss_forward.14} parent=31 // pred_check
        %p224 = pneg %p62
      $region34: #{msswd_loss_forward.14} parent=31 // pred_check_branch
        %226 = sbr.rel (%p224) target = $region36
      $region35: #{msswd_loss_forward.14} parent=31 // pred_region
        %p227 = scmp.lt.s32.totalorder %s13, 5
        %s228 = scalar_select %p227, %s13, 5
        %s229 = smul.addr %s228, 2
        %s230 = smul.addr %s229, 8
        %s231 = scalar_lea.vmem %s1, %s230
      $region36: #{msswd_loss_forward.14} parent=31 // pred_fallthru
        _
    $region32: #{msswd_loss_forward.14} parent=5 // pred_fallthru
      _
  $region6: #{msswd_loss_forward.14} parent=0 // loop_footer
    %s11 = sadd.s32 1, %s7
  $region7: #{msswd_loss_forward.14} parent=0 // loop_footer_branch
    %6 = sbr.rel target = $region3
  $region8: #{msswd_loss_forward.14} parent=0 // loop_exit
    _

// kernel: squeeze.111
$region0: #{squeeze.111}
  %s0 = inlined_call_operand.vmem [shape: bf16[2,1,6,6], index: 0, kind: input, shape index: {}]
  %s1 = inlined_call_operand.vmem [shape: bf16[1,72], index: 1, kind: output, shape index: {}]
  $region1: #{squeeze.111} parent=0
    #allocation0 [shape = 'u8[4096]{0}', space=vmem, size = 0x1000, scoped, tag = 'scoped mem for output reshape']
    #allocation1 [shape = 'u8[8192]{0}', space=vmem, size = 0x2000, scoped, tag = 'scoped mem for input reshape']
    %s3 = smul.u32 4, 2
    %s4 = sshll.u32 1, %s3
    %s5 = ssub.s32 %s4, 1
    %s6 = scalar_lea.vmem %s0, 4
    %s7 = sshrl.u32 %s5, 1
    %s8 = sor.u32 %s5, %s7
    %s9 = sand.u32 %s8, 85
    %s10 = sshrl.u32 %s9, 1
    %s11 = sor.u32 %s9, %s10
    %s12 = sand.u32 51, %s11
    %s13 = sshrl.u32 %s12, 2
    %s14 = sor.u32 %s12, %s13
    %s15 = sand.u32 15, %s14
    %v16 = vld [vmem:[%s6] sm:%s15]
    %v17 = vunpack.c.l.bf16 %v16
    %v18 = vunpack.c.h.bf16 %v16
    %s19 = scalar_lea.vmem [#allocation1], 8
    %20 = vst [vmem:[%s19] sm:%s5] %v17
    %s21 = sshrl.u32 %s5, 1
    %s22 = sor.u32 %s5, %s21
    %s23 = sand.u32 %s22, 85
    %s24 = sshrl.u32 %s23, 1
    %s25 = sor.u32 %s23, %s24
    %s26 = sand.u32 51, %s25
    %s27 = sshrl.u32 %s26, 2
    %s28 = sor.u32 %s26, %s27
    %s29 = sand.u32 15, %s28
    %v30 = vld [vmem:[%s0] sm:%s29]
    %v31 = vunpack.c.l.bf16 %v30
    %v32 = vunpack.c.h.bf16 %v30
    %33 = vst [vmem:[#allocation1] sm:%s5] %v31
    %v34 = vld [vmem:[#allocation1] sm:$0x1]
    %vm35 = vcmask 48128
    %36 = vst.msk [vmem:[#allocation0] sm:$0x1] %vm35, %v34
    %s37 = scalar_lea.vmem [#allocation1], 13
    %v38 = vld [vmem:[%s37] sm:$0x1]
    %39 = vrot.lane.b32.xlu0 %v38, 66
    %v40 = vpop.permute.xlu0 %39
    %vm41 = vcmask 589328
    %42 = vst.msk [vmem:[#allocation0] sm:$0x1] %vm41, %v40
    %s43 = scalar_lea.vmem [#allocation1], 12
    %v44 = vld [vmem:[%s43] sm:$0x1]
    %45 = vrot.lane.b32.xlu0 %v44, 60
    %v46 = vpop.permute.xlu0 %45
    %vm47 = vcmask 540128
    %48 = vst.msk [vmem:[#allocation0] sm:$0x1] %vm47, %v46
    %s49 = scalar_lea.vmem [#allocation1], 11
    %v50 = vld [vmem:[%s49] sm:$0x1]
    %51 = vrot.lane.b32.xlu0 %v50, 54
    %v52 = vpop.permute.xlu0 %51
    %vm53 = vcmask 490928
    %54 = vst.msk [vmem:[#allocation0] sm:$0x1] %vm53, %v52
    %s55 = scalar_lea.vmem [#allocation1], 10
    %v56 = vld [vmem:[%s55] sm:$0x1]
    %57 = vrot.lane.b32.xlu0 %v56, 48
    %v58 = vpop.permute.xlu0 %57
    %vm59 = vcmask 441728
    %60 = vst.msk [vmem:[#allocation0] sm:$0x1] %vm59, %v58
    %s61 = scalar_lea.vmem [#allocation1], 9
    %v62 = vld [vmem:[%s61] sm:$0x1]
    %63 = vrot.lane.b32.xlu0 %v62, 42
    %v64 = vpop.permute.xlu0 %63
    %vm65 = vcmask 392528
    %66 = vst.msk [vmem:[#allocation0] sm:$0x1] %vm65, %v64
    %s67 = scalar_lea.vmem [#allocation1], 8
    %v68 = vld [vmem:[%s67] sm:$0x1]
    %69 = vrot.lane.b32.xlu0 %v68, 36
    %v70 = vpop.permute.xlu0 %69
    %vm71 = vcmask 343328
    %72 = vst.msk [vmem:[#allocation0] sm:$0x1] %vm71, %v70
    %s73 = scalar_lea.vmem [#allocation1], 5
    %v74 = vld [vmem:[%s73] sm:$0x1]
    %75 = vrot.lane.b32.xlu0 %v74, 30
    %v76 = vpop.permute.xlu0 %75
    %vm77 = vcmask 294128
    %78 = vst.msk [vmem:[#allocation0] sm:$0x1] %vm77, %v76
    %s79 = scalar_lea.vmem [#allocation1], 4
    %v80 = vld [vmem:[%s79] sm:$0x1]
    %81 = vrot.lane.b32.xlu0 %v80, 24
    %v82 = vpop.permute.xlu0 %81
    %vm83 = vcmask 244928
    %84 = vst.msk [vmem:[#allocation0] sm:$0x1] %vm83, %v82
    %s85 = scalar_lea.vmem [#allocation1], 3
    %v86 = vld [vmem:[%s85] sm:$0x1]
    %87 = vrot.lane.b32.xlu0 %v86, 18
    %v88 = vpop.permute.xlu0 %87
    %vm89 = vcmask 195728
    %90 = vst.msk [vmem:[#allocation0] sm:$0x1] %vm89, %v88
    %s91 = scalar_lea.vmem [#allocation1], 2
    %v92 = vld [vmem:[%s91] sm:$0x1]
    %93 = vrot.lane.b32.xlu0 %v92, 12
    %v94 = vpop.permute.xlu0 %93
    %vm95 = vcmask 146528
    %96 = vst.msk [vmem:[#allocation0] sm:$0x1] %vm95, %v94
    %s97 = scalar_lea.vmem [#allocation1], 1
    %v98 = vld [vmem:[%s97] sm:$0x1]
    %99 = vrot.lane.b32.xlu0 %v98, 6
    %v100 = vpop.permute.xlu0 %99
    %vm101 = vcmask 97328
    %102 = vst.msk [vmem:[#allocation0] sm:$0x1] %vm101, %v100
    %s104 = smul.u32 1, 2
    %s105 = sshll.u32 1, %s104
    %s106 = ssub.s32 %s105, 1
    %s107 = sshrl.u32 %s104, 1
    %v108 = vld [vmem:[#allocation0] sm:%s106]
    %v109 = vpack.c.bf16 0.0, %v108
    %s110 = sshll.u32 1, %s107
    %s111 = ssub.s32 %s110, 1
    %112 = vst [vmem:[%s1] sm:%s111] %v109

// kernel: msswd_loss_forward.15
$region0: #{msswd_loss_forward.15}
  #allocation0 [shape = 'u32[]', space=smem, size = 0x4, offset = 0x4, fixed_abs, tag = 'smem constant byte address 0x4 - core index']
  #allocation1 [shape = 'u32[144,128]{1,0:T(1,128)}', space=vmem, size = 0x12000, scoped, tag = 'internal scratch']
  %s0 = inlined_call_operand.vmem [shape: f32[2,3,36], index: 0, kind: input, shape index: {}]
  %s1 = inlined_call_operand.vmem [shape: f32[2,3,36], index: 1, kind: output, shape index: {}]
  %s2 = sld [smem:[#allocation0]]
  $region14: #{msswd_loss_forward.15} parent=0
    _
  %s4 = ssub.s32 1, %s2
  %s5 = scalar_select 0, %s4, %s2
  // Predicated region
  $region2: #{msswd_loss_forward.15} parent=0 // pred_check
    _
  $region3: #{msswd_loss_forward.15} parent=0 // pred_check_branch
    %7 = sbr.rel (0) target = $region5
  $region4: #{msswd_loss_forward.15} parent=0 // pred_region
    _
  $region5: #{msswd_loss_forward.15} parent=0 // pred_fallthru
    _
  %v8 = vld [vmem:[%s0] sm:$0x7]
  %v9 = vld [vmem:[%s0 + $0x4] sm:$0x7]
  %vm10 = vcmp.gt.f32.partialorder %v8, 0.04045
  %vm11 = vcmp.gt.f32.partialorder %v9, 0.04045
  %v12 = vmax.f32 %v8, 0.04045
  %v13 = vmax.f32 %v9, 0.04045
  %v14 = vadd.f32 %v12, 0.055
  %v15 = vadd.f32 %v13, 0.055
  %v16 = vrcp.pop 1.055
  %v17 = vmul.f32 %v14, %v16
  %v18 = vmul.f32 %v15, %v16
  %v19 = vlog2.pop %v17
  %v20 = vmul.f32 %v19, 0.6931472
  %v21 = vlog2.pop %v18
  %v22 = vmul.f32 %v21, 0.6931472
  %v23 = vmul.f32 %v20, 2.4
  %v24 = vmul.f32 %v22, 2.4
  %v25 = vmul.f32 %v23, 1.442695
  %v26 = vpow.pop %v25
  %v27 = vmul.f32 %v24, 1.442695
  %v28 = vpow.pop %v27
  %v29 = vrcp.pop 12.92
  %v30 = vmul.f32 %v8, %v29
  %v31 = vmul.f32 %v9, %v29
  %v32 = vsel %vm10, %v26, %v30
  %v33 = vsel %vm11, %v28, %v31
  %v34 = vmul.f32 %v32, 0.41238657
  %v35 = vmul.f32 %v33, 0.41238657
  %v36 = vmul.f32 %v32, 0.35759148
  %v37 = vmul.f32 %v33, 0.35759148
  %v40 = vrot.slane %v36, 1
  %v41 = vrot.slane %v37, 1
  %v44 = vadd.f32 %v34, %v40
  %v45 = vadd.f32 %v35, %v41
  %v46 = vmul.f32 %v32, 0.18045048
  %v47 = vmul.f32 %v33, 0.18045048
  %v50 = vrot.slane %v46, 2
  %v51 = vrot.slane %v47, 2
  %v54 = vadd.f32 %v44, %v50
  %v55 = vadd.f32 %v45, %v51
  %v56 = vmul.f32 %v54, 1.0521569
  %v57 = vmul.f32 %v55, 1.0521569
  %v58 = vmul.f32 %v32, 0.21263683
  %v59 = vmul.f32 %v33, 0.21263683
  %v60 = vmul.f32 %v32, 0.71518296
  %v61 = vmul.f32 %v33, 0.71518296
  %v64 = vrot.slane %v60, 1
  %v65 = vrot.slane %v61, 1
  %v68 = vadd.f32 %v58, %v64
  %v69 = vadd.f32 %v59, %v65
  %v70 = vmul.f32 %v32, 0.0721802
  %v71 = vmul.f32 %v33, 0.0721802
  %v74 = vrot.slane %v70, 2
  %v75 = vrot.slane %v71, 2
  %v78 = vadd.f32 %v68, %v74
  %v79 = vadd.f32 %v69, %v75
  %v80 = vmul.f32 %v32, 0.01933062
  %v81 = vmul.f32 %v33, 0.01933062
  %v82 = vmul.f32 %v32, 0.11919716
  %v83 = vmul.f32 %v33, 0.11919716
  %v86 = vrot.slane %v82, 1
  %v87 = vrot.slane %v83, 1
  %v90 = vadd.f32 %v80, %v86
  %v91 = vadd.f32 %v81, %v87
  %v92 = vmul.f32 %v32, 0.9503726
  %v93 = vmul.f32 %v33, 0.9503726
  %v96 = vrot.slane %v92, 2
  %v97 = vrot.slane %v93, 2
  %v100 = vadd.f32 %v90, %v96
  %v101 = vadd.f32 %v91, %v97
  %v102 = vmul.f32 %v100, 0.9183577
  %v103 = vmul.f32 %v101, 0.9183577
  %v104 = vmax.f32 %v56, 0.008856452
  %v105 = vmax.f32 %v57, 0.008856452
  %v106 = vlog2.pop %v104
  %v107 = vmul.f32 %v106, 0.6931472
  %v108 = vlog2.pop %v105
  %v109 = vmul.f32 %v108, 0.6931472
  %v110 = vmul.f32 %v107, 0.33333334
  %v111 = vmul.f32 %v109, 0.33333334
  %v112 = vmul.f32 %v110, 1.442695
  %v113 = vpow.pop %v112
  %v114 = vmul.f32 %v111, 1.442695
  %v115 = vpow.pop %v114
  %vm116 = vcmp.gt.f32.partialorder %v56, 0.008856452
  %vm117 = vcmp.gt.f32.partialorder %v57, 0.008856452
  %v118 = vmul.f32 %v56, 7.787037
  %v119 = vmul.f32 %v57, 7.787037
  %v120 = vadd.f32 %v118, 0.13793103
  %v121 = vadd.f32 %v119, 0.13793103
  %v122 = vsel %vm116, %v113, %v120
  %v123 = vsel %vm117, %v115, %v121
  %v124 = vmax.f32 %v78, 0.008856452
  %v125 = vmax.f32 %v79, 0.008856452
  %v126 = vlog2.pop %v124
  %v127 = vmul.f32 %v126, 0.6931472
  %v128 = vlog2.pop %v125
  %v129 = vmul.f32 %v128, 0.6931472
  %v130 = vmul.f32 %v127, 0.33333334
  %v131 = vmul.f32 %v129, 0.33333334
  %v132 = vmul.f32 %v130, 1.442695
  %v133 = vpow.pop %v132
  %v134 = vmul.f32 %v131, 1.442695
  %v135 = vpow.pop %v134
  %vm136 = vcmp.gt.f32.partialorder %v78, 0.008856452
  %vm137 = vcmp.gt.f32.partialorder %v79, 0.008856452
  %v138 = vmul.f32 %v78, 7.787037
  %v139 = vmul.f32 %v79, 7.787037
  %v140 = vadd.f32 %v138, 0.13793103
  %v141 = vadd.f32 %v139, 0.13793103
  %v142 = vsel %vm136, %v133, %v140
  %v143 = vsel %vm137, %v135, %v141
  %v144 = vmax.f32 %v102, 0.008856452
  %v145 = vmax.f32 %v103, 0.008856452
  %v146 = vlog2.pop %v144
  %v147 = vmul.f32 %v146, 0.6931472
  %v148 = vlog2.pop %v145
  %v149 = vmul.f32 %v148, 0.6931472
  %v150 = vmul.f32 %v147, 0.33333334
  %v151 = vmul.f32 %v149, 0.33333334
  %v152 = vmul.f32 %v150, 1.442695
  %v153 = vpow.pop %v152
  %v154 = vmul.f32 %v151, 1.442695
  %v155 = vpow.pop %v154
  %vm156 = vcmp.gt.f32.partialorder %v102, 0.008856452
  %vm157 = vcmp.gt.f32.partialorder %v103, 0.008856452
  %v158 = vmul.f32 %v102, 7.787037
  %v159 = vmul.f32 %v103, 7.787037
  %v160 = vadd.f32 %v158, 0.13793103
  %v161 = vadd.f32 %v159, 0.13793103
  %v162 = vsel %vm156, %v153, %v160
  %v163 = vsel %vm157, %v155, %v161
  %v164 = vmul.f32 %v142, 116.0
  %v165 = vmul.f32 %v143, 116.0
  %v166 = vsub.f32 %v164, 16.0
  %v167 = vsub.f32 %v165, 16.0
  %vm168 = vcmask 286720
  %169 = vst.msk [vmem:[%s1] sm:$0x1] %vm168, %v166
  %170 = vst.msk [vmem:[%s1 + $0x4] sm:$0x1] %vm168, %v167
  %v171 = vsub.f32 %v122, %v142
  %v172 = vsub.f32 %v123, %v143
  %v173 = vmul.f32 %v171, 500.0
  %v174 = vmul.f32 %v172, 500.0
  %175 = vst.msk [vmem:[%s1 + $0x1] sm:$0x1] %vm168, %v173
  %176 = vst.msk [vmem:[%s1 + $0x5] sm:$0x1] %vm168, %v174
  %v177 = vsub.f32 %v142, %v162
  %v178 = vsub.f32 %v143, %v163
  %v179 = vmul.f32 %v177, 200.0
  %v180 = vmul.f32 %v178, 200.0
  %181 = vst.msk [vmem:[%s1 + $0x2] sm:$0x1] %vm168, %v179
  %182 = vst.msk [vmem:[%s1 + $0x6] sm:$0x1] %vm168, %v180
  // Predicated region
  $region6: #{msswd_loss_forward.15} parent=0 // pred_check
    _
  $region7: #{msswd_loss_forward.15} parent=0 // pred_check_branch
    %184 = sbr.rel (0) target = $region9
  $region8: #{msswd_loss_forward.15} parent=0 // pred_region
    _
  $region9: #{msswd_loss_forward.15} parent=0 // pred_fallthru
    _
  // Predicated region
  $region10: #{msswd_loss_forward.15} parent=0 // pred_check
    _
  $region11: #{msswd_loss_forward.15} parent=0 // pred_check_branch
    %186 = sbr.rel (0) target = $region13
  $region12: #{msswd_loss_forward.15} parent=0 // pred_region
    _
  $region13: #{msswd_loss_forward.15} parent=0 // pred_fallthru
    _

// kernel: msswd_loss_forward.16
$region0: #{msswd_loss_forward.16}
  #allocation0 [shape = 'u32[]', space=smem, size = 0x4, offset = 0x4, fixed_abs, tag = 'smem constant byte address 0x4 - core index']
  #allocation1 [shape = 'u32[144,128]{1,0:T(1,128)}', space=vmem, size = 0x12000, scoped, tag = 'internal scratch']
  %s0 = inlined_call_operand.vmem [shape: bf16[24,384], index: 0, kind: input, shape index: {}]
  %s1 = inlined_call_operand.vmem [shape: bf16[384,256], index: 1, kind: input, shape index: {}]
  %s2 = inlined_call_operand.vmem [shape: f32[24,256], index: 2, kind: output, shape index: {}]
  %s3 = sld [smem:[#allocation0]]
  $region116: #{msswd_loss_forward.16} parent=0
    _
  %s5 = ssub.s32 1, %s3
  %s6 = scalar_select 0, %s5, %s3
  $region1: #{msswd_loss_forward.16} parent=0
    #allocation2 [shape = 'u8[196608]{0}', space=vmem, size = 0x30000, scoped, tag = 'input window, operand 1']
    #allocation3 [shape = 'u8[24576]{0}', space=vmem, size = 0x6000, scoped, tag = 'output window, operand 0']
    loop: start=0, step=1, limit=4
    $region2: #{msswd_loss_forward.16} parent=1 // loop_pre_header
      _
    $region3: #{msswd_loss_forward.16} parent=1 // loop_header
      %s8 = sphi 0, %s12
      %p9 = scmp.ge.s32.totalorder %s8, 4
      %s16 = sphi 0, %s16
      %s18 = sphi 0, %s16
      %s19 = sphi 0, %s18
      %s33 = sphi 0, %s19
      %s39 = sphi 0, %s41
      %s42 = sphi 0, %s39
      %s43 = sphi 0, %s42
      %s59 = sphi 0, %s43
      %s65 = sphi 0, %s67
      %s68 = sphi 0, %s65
      %s69 = sphi 0, %s68
      %s85 = sphi 0, %s69
    $region4: #{msswd_loss_forward.16} parent=1 // loop_header_branch
      %11 = sbr.rel (%p9) target = $region8
    $region5: #{msswd_loss_forward.16} parent=1 // loop_body
      %s13 = ssub.s32 %s8, 1
      %s14 = ssub.s32 %s8, 2
      %s15 = sadd.s32 %s8, 1
      %s17 = sadd.s32 %s16, 1
      %p20 = scmp.eq.s32.totalorder %s8, 1
      %p21 = scmp.ne.s32.totalorder %s16, %s18
      %p22 = scmp.eq.s32.totalorder %s8, 0
      %p23 = por %p21, %p22
      %p24 = scmp.ne.s32.totalorder %s16, %s18
      %p25 = scmp.eq.s32.totalorder %s13, 1
      %p26 = por %p24, %p25
      %p27 = scmp.ne.s32.totalorder %s18, %s19
      %p28 = scmp.eq.s32.totalorder %s13, 0
      %p29 = por %p27, %p28
      %p30 = scmp.ne.s32.totalorder %s18, %s19
      %p31 = scmp.eq.s32.totalorder %s14, 1
      %p32 = por %p30, %p31
      %p34 = scmp.ne.s32.totalorder %s19, %s33
      %p35 = scmp.eq.s32.totalorder %s14, 0
      %p36 = por %p34, %p35
      %s37 = ssub.s32 %s8, %s15
      %p38 = scmp.eq.s32.totalorder %s37, 0
      %s40 = sadd.s32 %s39, 1
      %s41 = scalar_select %p38, %s39, %s40
      %p44 = pneg %p38
      %p45 = scmp.eq.s32.totalorder %s8, 1
      %p46 = por %p44, %p45
      %p47 = scmp.ne.s32.totalorder %s39, %s42
      %p48 = scmp.eq.s32.totalorder %s8, 0
      %p49 = por %p47, %p48
      %p50 = scmp.ne.s32.totalorder %s39, %s42
      %p51 = scmp.eq.s32.totalorder %s13, 1
      %p52 = por %p50, %p51
      %p53 = scmp.ne.s32.totalorder %s42, %s43
      %p54 = scmp.eq.s32.totalorder %s13, 0
      %p55 = por %p53, %p54
      %p56 = scmp.ne.s32.totalorder %s42, %s43
      %p57 = scmp.eq.s32.totalorder %s14, 1
      %p58 = por %p56, %p57
      %p60 = scmp.ne.s32.totalorder %s43, %s59
      %p61 = scmp.eq.s32.totalorder %s14, 0
      %p62 = por %p60, %p61
      %s63 = ssub.s32 %s8, %s15
      %p64 = scmp.eq.s32.totalorder %s63, 0
      %s66 = sadd.s32 %s65, 1
      %s67 = scalar_select %p64, %s65, %s66
      %p70 = pneg %p64
      %p71 = scmp.eq.s32.totalorder %s8, 1
      %p72 = por %p70, %p71
      %p73 = scmp.ne.s32.totalorder %s65, %s68
      %p74 = scmp.eq.s32.totalorder %s8, 0
      %p75 = por %p73, %p74
      %p76 = scmp.ne.s32.totalorder %s65, %s68
      %p77 = scmp.eq.s32.totalorder %s13, 1
      %p78 = por %p76, %p77
      %p79 = scmp.ne.s32.totalorder %s68, %s69
      %p80 = scmp.eq.s32.totalorder %s13, 0
      %p81 = por %p79, %p80
      %p82 = scmp.ne.s32.totalorder %s68, %s69
      %p83 = scmp.eq.s32.totalorder %s14, 1
      %p84 = por %p82, %p83
      %p86 = scmp.ne.s32.totalorder %s69, %s85
      %p87 = scmp.eq.s32.totalorder %s14, 0
      %p88 = por %p86, %p87
      %p89 = scmp.le.s32.totalorder 1, %s8
      %p90 = scmp.lt.s32.totalorder %s8, 3
      %p91 = pnand %p89, %p90
      %p92 = pneg %p91
      // Predicated region
      $region9: #{msswd_loss_forward.16} parent=5 // pred_check
        _
      $region10: #{msswd_loss_forward.16} parent=5 // pred_check_branch
        %94 = sbr.rel (%p91) target = $region12
      $region11: #{msswd_loss_forward.16} parent=5 // pred_region
        %s95 = ssub.s32 %s8, 1
        // Predicated region
        $region13: #{msswd_loss_forward.16} parent=11 // pred_check
          %p96 = pneg %p29
        $region14: #{msswd_loss_forward.16} parent=11 // pred_check_branch
          %98 = sbr.rel (%p96) target = $region16
        $region15: #{msswd_loss_forward.16} parent=11 // pred_region
          _
        $region16: #{msswd_loss_forward.16} parent=11 // pred_fallthru
          _
      $region12: #{msswd_loss_forward.16} parent=5 // pred_fallthru
        _
      %p99 = scmp.lt.s32.totalorder %s8, 2
      // Predicated region
      $region17: #{msswd_loss_forward.16} parent=5 // pred_check
        %p100 = pneg %p99
      $region18: #{msswd_loss_forward.16} parent=5 // pred_check_branch
        %102 = sbr.rel (%p100) target = $region20
      $region19: #{msswd_loss_forward.16} parent=5 // pred_region
        // Predicated region
        $region21: #{msswd_loss_forward.16} parent=19 // pred_check
          %p103 = pneg %p49
        $region22: #{msswd_loss_forward.16} parent=19 // pred_check_branch
          %105 = sbr.rel (%p103) target = $region24
        $region23: #{msswd_loss_forward.16} parent=19 // pred_region
          %s106 = sand.u32 %s39, 1
          %s107 = sand.u32 %s39, 1
          %s108 = smul.addr %s107, 192
          %s109 = scalar_lea.vmem [#allocation2], %s108
          %s110 = smul.addr %s8, 4
          %s111 = scalar_lea.vmem %s1, %s110
          // Predicated region
          $region25: #{msswd_loss_forward.16} parent=23 // pred_check
            _
          $region26: #{msswd_loss_forward.16} parent=23 // pred_check_branch
            %113 = sbr.rel (0) target = $region28
          $region27: #{msswd_loss_forward.16} parent=23 // pred_region
            // Predicated region
            $region29: #{msswd_loss_forward.16} parent=27 // pred_check
              _
            $region30: #{msswd_loss_forward.16} parent=27 // pred_check_branch
              %115 = sbr.rel target = $region32
            $region31: #{msswd_loss_forward.16} parent=27 // pred_region
              // Predicated region
              $region44: #{msswd_loss_forward.16} parent=31 // pred_check
                _
              $region45: #{msswd_loss_forward.16} parent=31 // pred_check_branch
                %225 = sbr.rel (0) target = $region47
              $region46: #{msswd_loss_forward.16} parent=31 // pred_region
                loop: start=0, step=1, limit=1
                $region48: #{msswd_loss_forward.16} parent=46 // loop_pre_header
                  _
                $region49: #{msswd_loss_forward.16} parent=46 // loop_header
                  %s227 = sphi 0, %s231
                  %p228 = scmp.ge.s32.totalorder %s227, 1
                  %s232 = sphi %s111, %s111
                  %s233 = sphi %s109, %s109
                $region50: #{msswd_loss_forward.16} parent=46 // loop_header_branch
                  %230 = sbr.rel (%p228) target = $region54
                $region51: #{msswd_loss_forward.16} parent=46 // loop_body
                  _
                $region52: #{msswd_loss_forward.16} parent=46 // loop_footer
                  %s231 = sadd.s32 1, %s227
                $region53: #{msswd_loss_forward.16} parent=46 // loop_footer_branch
                  %226 = sbr.rel target = $region49
                $region54: #{msswd_loss_forward.16} parent=46 // loop_exit
                  _
                %s235 = ssub.s32 16, 1
                loop: start=0, step=1, limit=1
                $region55: #{msswd_loss_forward.16} parent=46 // loop_pre_header
                  _
                $region56: #{msswd_loss_forward.16} parent=46 // loop_header
                  %s237 = sphi 0, %s241
                  %p238 = scmp.ge.s32.totalorder %s237, 1
                  %s242 = sphi %s111, %s111
                  %s243 = sphi %s109, %s109
                $region57: #{msswd_loss_forward.16} parent=46 // loop_header_branch
                  %240 = sbr.rel (%p238) target = $region61
                $region58: #{msswd_loss_forward.16} parent=46 // loop_body
                  %v244 = vld [vmem:[%s242] sm:%s235]
                  %245 = vst [vmem:[%s243] sm:%s235] %v244
                  %v246 = vld [vmem:[%s242 + $0x8] sm:%s235]
                  %247 = vst [vmem:[%s243 + $0x4] sm:%s235] %v246
                  %v248 = vld [vmem:[%s242 + $0x10] sm:%s235]
                  %249 = vst [vmem:[%s243 + $0x8] sm:%s235] %v248
                  %v250 = vld [vmem:[%s242 + $0x18] sm:%s235]
                  %251 = vst [vmem:[%s243 + $0xc] sm:%s235] %v250
                  %v252 = vld [vmem:[%s242 + $0x20] sm:%s235]
                  %253 = vst [vmem:[%s243 + $0x10] sm:%s235] %v252
                  %v254 = vld [vmem:[%s242 + $0x28] sm:%s235]
                  %255 = vst [vmem:[%s243 + $0x14] sm:%s235] %v254
                  %v256 = vld [vmem:[%s242 + $0x30] sm:%s235]
                  %257 = vst [vmem:[%s243 + $0x18] sm:%s235] %v256
                  %v258 = vld [vmem:[%s242 + $0x38] sm:%s235]
                  %259 = vst [vmem:[%s243 + $0x1c] sm:%s235] %v258
                  %v260 = vld [vmem:[%s242 + $0x40] sm:%s235]
                  %261 = vst [vmem:[%s243 + $0x20] sm:%s235] %v260
                  %v262 = vld [vmem:[%s242 + $0x48] sm:%s235]
                  %263 = vst [vmem:[%s243 + $0x24] sm:%s235] %v262
                  %v264 = vld [vmem:[%s242 + $0x50] sm:%s235]
                  %265 = vst [vmem:[%s243 + $0x28] sm:%s235] %v264
                  %v266 = vld [vmem:[%s242 + $0x58] sm:%s235]
                  %267 = vst [vmem:[%s243 + $0x2c] sm:%s235] %v266
                  %v268 = vld [vmem:[%s242 + $0x60] sm:%s235]
                  %269 = vst [vmem:[%s243 + $0x30] sm:%s235] %v268
                  %v270 = vld [vmem:[%s242 + $0x68] sm:%s235]
                  %271 = vst [vmem:[%s243 + $0x34] sm:%s235] %v270
                  %v272 = vld [vmem:[%s242 + $0x70] sm:%s235]
                  %273 = vst [vmem:[%s243 + $0x38] sm:%s235] %v272
                  %v274 = vld [vmem:[%s242 + $0x78] sm:%s235]
                  %275 = vst [vmem:[%s243 + $0x3c] sm:%s235] %v274
                  %v276 = vld [vmem:[%s242 + $0x80] sm:%s235]
                  %277 = vst [vmem:[%s243 + $0x40] sm:%s235] %v276
                  %v278 = vld [vmem:[%s242 + $0x88] sm:%s235]
                  %279 = vst [vmem:[%s243 + $0x44] sm:%s235] %v278
                  %v280 = vld [vmem:[%s242 + $0x90] sm:%s235]
                  %281 = vst [vmem:[%s243 + $0x48] sm:%s235] %v280
                  %v282 = vld [vmem:[%s242 + $0x98] sm:%s235]
                  %283 = vst [vmem:[%s243 + $0x4c] sm:%s235] %v282
                  %v284 = vld [vmem:[%s242 + $0xa0] sm:%s235]
                  %285 = vst [vmem:[%s243 + $0x50] sm:%s235] %v284
                  %v286 = vld [vmem:[%s242 + $0xa8] sm:%s235]
                  %287 = vst [vmem:[%s243 + $0x54] sm:%s235] %v286
                  %v288 = vld [vmem:[%s242 + $0xb0] sm:%s235]
                  %289 = vst [vmem:[%s243 + $0x58] sm:%s235] %v288
                  %v290 = vld [vmem:[%s242 + $0xb8] sm:%s235]
                  %291 = vst [vmem:[%s243 + $0x5c] sm:%s235] %v290
                  %v292 = vld [vmem:[%s242 + $0xc0] sm:%s235]
                  %293 = vst [vmem:[%s243 + $0x60] sm:%s235] %v292
                  %v294 = vld [vmem:[%s242 + $0xc8] sm:%s235]
                  %295 = vst [vmem:[%s243 + $0x64] sm:%s235] %v294
                  %v296 = vld [vmem:[%s242 + $0xd0] sm:%s235]
                  %297 = vst [vmem:[%s243 + $0x68] sm:%s235] %v296
                  %v298 = vld [vmem:[%s242 + $0xd8] sm:%s235]
                  %299 = vst [vmem:[%s243 + $0x6c] sm:%s235] %v298
                  %v300 = vld [vmem:[%s242 + $0xe0] sm:%s235]
                  %301 = vst [vmem:[%s243 + $0x70] sm:%s235] %v300
                  %v302 = vld [vmem:[%s242 + $0xe8] sm:%s235]
                  %303 = vst [vmem:[%s243 + $0x74] sm:%s235] %v302
                  %v304 = vld [vmem:[%s242 + $0xf0] sm:%s235]
                  %305 = vst [vmem:[%s243 + $0x78] sm:%s235] %v304
                  %v306 = vld [vmem:[%s242 + $0xf8] sm:%s235]
                  %307 = vst [vmem:[%s243 + $0x7c] sm:%s235] %v306
                  %v308 = vld [vmem:[%s242 + $0x100] sm:%s235]
                  %309 = vst [vmem:[%s243 + $0x80] sm:%s235] %v308
                  %v310 = vld [vmem:[%s242 + $0x108] sm:%s235]
                  %311 = vst [vmem:[%s243 + $0x84] sm:%s235] %v310
                  %v312 = vld [vmem:[%s242 + $0x110] sm:%s235]
                  %313 = vst [vmem:[%s243 + $0x88] sm:%s235] %v312
                  %v314 = vld [vmem:[%s242 + $0x118] sm:%s235]
                  %315 = vst [vmem:[%s243 + $0x8c] sm:%s235] %v314
                  %v316 = vld [vmem:[%s242 + $0x120] sm:%s235]
                  %317 = vst [vmem:[%s243 + $0x90] sm:%s235] %v316
                  %v318 = vld [vmem:[%s242 + $0x128] sm:%s235]
                  %319 = vst [vmem:[%s243 + $0x94] sm:%s235] %v318
                  %v320 = vld [vmem:[%s242 + $0x130] sm:%s235]
                  %321 = vst [vmem:[%s243 + $0x98] sm:%s235] %v320
                  %v322 = vld [vmem:[%s242 + $0x138] sm:%s235]
                  %323 = vst [vmem:[%s243 + $0x9c] sm:%s235] %v322
                  %v324 = vld [vmem:[%s242 + $0x140] sm:%s235]
                  %325 = vst [vmem:[%s243 + $0xa0] sm:%s235] %v324
                  %v326 = vld [vmem:[%s242 + $0x148] sm:%s235]
                  %327 = vst [vmem:[%s243 + $0xa4] sm:%s235] %v326
                  %v328 = vld [vmem:[%s242 + $0x150] sm:%s235]
                  %329 = vst [vmem:[%s243 + $0xa8] sm:%s235] %v328
                  %v330 = vld [vmem:[%s242 + $0x158] sm:%s235]
                  %331 = vst [vmem:[%s243 + $0xac] sm:%s235] %v330
                  %v332 = vld [vmem:[%s242 + $0x160] sm:%s235]
                  %333 = vst [vmem:[%s243 + $0xb0] sm:%s235] %v332
                  %v334 = vld [vmem:[%s242 + $0x168] sm:%s235]
                  %335 = vst [vmem:[%s243 + $0xb4] sm:%s235] %v334
                  %v336 = vld [vmem:[%s242 + $0x170] sm:%s235]
                  %337 = vst [vmem:[%s243 + $0xb8] sm:%s235] %v336
                  %v338 = vld [vmem:[%s242 + $0x178] sm:%s235]
                  %339 = vst [vmem:[%s243 + $0xbc] sm:%s235] %v338
                $region59: #{msswd_loss_forward.16} parent=46 // loop_footer
                  %s241 = sadd.s32 1, %s237
                $region60: #{msswd_loss_forward.16} parent=46 // loop_footer_branch
                  %236 = sbr.rel target = $region56
                $region61: #{msswd_loss_forward.16} parent=46 // loop_exit
                  _
              $region47: #{msswd_loss_forward.16} parent=31 // pred_fallthru
                _
            $region32: #{msswd_loss_forward.16} parent=27 // pred_fallthru
              _
            // Predicated region
            $region33: #{msswd_loss_forward.16} parent=27 // pred_check
              _
            $region34: #{msswd_loss_forward.16} parent=27 // pred_check_branch
              %117 = sbr.rel (0) target = $region36
            $region35: #{msswd_loss_forward.16} parent=27 // pred_region
              %s119 = ssub.s32 16, 1
              loop: start=0, step=1, limit=1
              $region37: #{msswd_loss_forward.16} parent=35 // loop_pre_header
                _
              $region38: #{msswd_loss_forward.16} parent=35 // loop_header
                %s121 = sphi 0, %s125
                %p122 = scmp.ge.s32.totalorder %s121, 1
                %s126 = sphi %s111, %s111
                %s127 = sphi %s109, %s109
              $region39: #{msswd_loss_forward.16} parent=35 // loop_header_branch
                %124 = sbr.rel (%p122) target = $region43
              $region40: #{msswd_loss_forward.16} parent=35 // loop_body
                %v128 = vld [vmem:[%s126] sm:%s119]
                %129 = vst [vmem:[%s127] sm:%s119] %v128
                %v130 = vld [vmem:[%s126 + $0x8] sm:%s119]
                %131 = vst [vmem:[%s127 + $0x4] sm:%s119] %v130
                %v132 = vld [vmem:[%s126 + $0x10] sm:%s119]
                %133 = vst [vmem:[%s127 + $0x8] sm:%s119] %v132
                %v134 = vld [vmem:[%s126 + $0x18] sm:%s119]
                %135 = vst [vmem:[%s127 + $0xc] sm:%s119] %v134
                %v136 = vld [vmem:[%s126 + $0x20] sm:%s119]
                %137 = vst [vmem:[%s127 + $0x10] sm:%s119] %v136
                %v138 = vld [vmem:[%s126 + $0x28] sm:%s119]
                %139 = vst [vmem:[%s127 + $0x14] sm:%s119] %v138
                %v140 = vld [vmem:[%s126 + $0x30] sm:%s119]
                %141 = vst [vmem:[%s127 + $0x18] sm:%s119] %v140
                %v142 = vld [vmem:[%s126 + $0x38] sm:%s119]
                %143 = vst [vmem:[%s127 + $0x1c] sm:%s119] %v142
                %v144 = vld [vmem:[%s126 + $0x40] sm:%s119]
                %145 = vst [vmem:[%s127 + $0x20] sm:%s119] %v144
                %v146 = vld [vmem:[%s126 + $0x48] sm:%s119]
                %147 = vst [vmem:[%s127 + $0x24] sm:%s119] %v146
                %v148 = vld [vmem:[%s126 + $0x50] sm:%s119]
                %149 = vst [vmem:[%s127 + $0x28] sm:%s119] %v148
                %v150 = vld [vmem:[%s126 + $0x58] sm:%s119]
                %151 = vst [vmem:[%s127 + $0x2c] sm:%s119] %v150
                %v152 = vld [vmem:[%s126 + $0x60] sm:%s119]
                %153 = vst [vmem:[%s127 + $0x30] sm:%s119] %v152
                %v154 = vld [vmem:[%s126 + $0x68] sm:%s119]
                %155 = vst [vmem:[%s127 + $0x34] sm:%s119] %v154
                %v156 = vld [vmem:[%s126 + $0x70] sm:%s119]
                %157 = vst [vmem:[%s127 + $0x38] sm:%s119] %v156
                %v158 = vld [vmem:[%s126 + $0x78] sm:%s119]
                %159 = vst [vmem:[%s127 + $0x3c] sm:%s119] %v158
                %v160 = vld [vmem:[%s126 + $0x80] sm:%s119]
                %161 = vst [vmem:[%s127 + $0x40] sm:%s119] %v160
                %v162 = vld [vmem:[%s126 + $0x88] sm:%s119]
                %163 = vst [vmem:[%s127 + $0x44] sm:%s119] %v162
                %v164 = vld [vmem:[%s126 + $0x90] sm:%s119]
                %165 = vst [vmem:[%s127 + $0x48] sm:%s119] %v164
                %v166 = vld [vmem:[%s126 + $0x98] sm:%s119]
                %167 = vst [vmem:[%s127 + $0x4c] sm:%s119] %v166
                %v168 = vld [vmem:[%s126 + $0xa0] sm:%s119]
                %169 = vst [vmem:[%s127 + $0x50] sm:%s119] %v168
                %v170 = vld [vmem:[%s126 + $0xa8] sm:%s119]
                %171 = vst [vmem:[%s127 + $0x54] sm:%s119] %v170
                %v172 = vld [vmem:[%s126 + $0xb0] sm:%s119]
                %173 = vst [vmem:[%s127 + $0x58] sm:%s119] %v172
                %v174 = vld [vmem:[%s126 + $0xb8] sm:%s119]
                %175 = vst [vmem:[%s127 + $0x5c] sm:%s119] %v174
                %v176 = vld [vmem:[%s126 + $0xc0] sm:%s119]
                %177 = vst [vmem:[%s127 + $0x60] sm:%s119] %v176
                %v178 = vld [vmem:[%s126 + $0xc8] sm:%s119]
                %179 = vst [vmem:[%s127 + $0x64] sm:%s119] %v178
                %v180 = vld [vmem:[%s126 + $0xd0] sm:%s119]
                %181 = vst [vmem:[%s127 + $0x68] sm:%s119] %v180
                %v182 = vld [vmem:[%s126 + $0xd8] sm:%s119]
                %183 = vst [vmem:[%s127 + $0x6c] sm:%s119] %v182
                %v184 = vld [vmem:[%s126 + $0xe0] sm:%s119]
                %185 = vst [vmem:[%s127 + $0x70] sm:%s119] %v184
                %v186 = vld [vmem:[%s126 + $0xe8] sm:%s119]
                %187 = vst [vmem:[%s127 + $0x74] sm:%s119] %v186
                %v188 = vld [vmem:[%s126 + $0xf0] sm:%s119]
                %189 = vst [vmem:[%s127 + $0x78] sm:%s119] %v188
                %v190 = vld [vmem:[%s126 + $0xf8] sm:%s119]
                %191 = vst [vmem:[%s127 + $0x7c] sm:%s119] %v190
                %v192 = vld [vmem:[%s126 + $0x100] sm:%s119]
                %193 = vst [vmem:[%s127 + $0x80] sm:%s119] %v192
                %v194 = vld [vmem:[%s126 + $0x108] sm:%s119]
                %195 = vst [vmem:[%s127 + $0x84] sm:%s119] %v194
                %v196 = vld [vmem:[%s126 + $0x110] sm:%s119]
                %197 = vst [vmem:[%s127 + $0x88] sm:%s119] %v196
                %v198 = vld [vmem:[%s126 + $0x118] sm:%s119]
                %199 = vst [vmem:[%s127 + $0x8c] sm:%s119] %v198
                %v200 = vld [vmem:[%s126 + $0x120] sm:%s119]
                %201 = vst [vmem:[%s127 + $0x90] sm:%s119] %v200
                %v202 = vld [vmem:[%s126 + $0x128] sm:%s119]
                %203 = vst [vmem:[%s127 + $0x94] sm:%s119] %v202
                %v204 = vld [vmem:[%s126 + $0x130] sm:%s119]
                %205 = vst [vmem:[%s127 + $0x98] sm:%s119] %v204
                %v206 = vld [vmem:[%s126 + $0x138] sm:%s119]
                %207 = vst [vmem:[%s127 + $0x9c] sm:%s119] %v206
                %v208 = vld [vmem:[%s126 + $0x140] sm:%s119]
                %209 = vst [vmem:[%s127 + $0xa0] sm:%s119] %v208
                %v210 = vld [vmem:[%s126 + $0x148] sm:%s119]
                %211 = vst [vmem:[%s127 + $0xa4] sm:%s119] %v210
                %v212 = vld [vmem:[%s126 + $0x150] sm:%s119]
                %213 = vst [vmem:[%s127 + $0xa8] sm:%s119] %v212
                %v214 = vld [vmem:[%s126 + $0x158] sm:%s119]
                %215 = vst [vmem:[%s127 + $0xac] sm:%s119] %v214
                %v216 = vld [vmem:[%s126 + $0x160] sm:%s119]
                %217 = vst [vmem:[%s127 + $0xb0] sm:%s119] %v216
                %v218 = vld [vmem:[%s126 + $0x168] sm:%s119]
                %219 = vst [vmem:[%s127 + $0xb4] sm:%s119] %v218
                %v220 = vld [vmem:[%s126 + $0x170] sm:%s119]
                %221 = vst [vmem:[%s127 + $0xb8] sm:%s119] %v220
                %v222 = vld [vmem:[%s126 + $0x178] sm:%s119]
                %223 = vst [vmem:[%s127 + $0xbc] sm:%s119] %v222
              $region41: #{msswd_loss_forward.16} parent=35 // loop_footer
                %s125 = sadd.s32 1, %s121
              $region42: #{msswd_loss_forward.16} parent=35 // loop_footer_branch
                %120 = sbr.rel target = $region38
              $region43: #{msswd_loss_forward.16} parent=35 // loop_exit
                _
            $region36: #{msswd_loss_forward.16} parent=27 // pred_fallthru
              _
          $region28: #{msswd_loss_forward.16} parent=23 // pred_fallthru
            _
          %340 = vnop
        $region24: #{msswd_loss_forward.16} parent=19 // pred_fallthru
          _
      $region20: #{msswd_loss_forward.16} parent=5 // pred_fallthru
        _
      %p341 = scmp.le.s32.totalorder 1, %s8
      %p342 = scmp.lt.s32.totalorder %s8, 3
      %p343 = pnand %p341, %p342
      %p344 = pneg %p343
      // Predicated region
      $region62: #{msswd_loss_forward.16} parent=5 // pred_check
        _
      $region63: #{msswd_loss_forward.16} parent=5 // pred_check_branch
        %346 = sbr.rel (%p343) target = $region65
      $region64: #{msswd_loss_forward.16} parent=5 // pred_region
        %s347 = ssub.s32 %s8, 1
        %s348 = sand.u32 %s42, 1
        %s349 = sand.u32 %s42, 1
        %s350 = smul.addr %s349, 192
        %s351 = scalar_lea.vmem [#allocation2], %s350
        // Predicated region
        $region66: #{msswd_loss_forward.16} parent=64 // pred_check
          %p352 = pneg %p55
        $region67: #{msswd_loss_forward.16} parent=64 // pred_check_branch
          %354 = sbr.rel (%p352) target = $region69
        $region68: #{msswd_loss_forward.16} parent=64 // pred_region
          _
        $region69: #{msswd_loss_forward.16} parent=64 // pred_fallthru
          _
        %p355 = pneg %p29
        %p356 = pneg %p26
        %s357 = sand.u32 %s42, 1
        %s358 = sand.u32 %s42, 1
        %s359 = smul.addr %s358, 192
        %s360 = scalar_lea.vmem [#allocation2], %s359
        %p361 = pneg %p55
        %p362 = pneg %p52
        %p363 = pneg %p81
        %p364 = pneg %p78
        %s365 = sand.u32 %s68, 1
        %s366 = sand.u32 %s68, 1
        %s367 = smul.addr %s366, 24
        %s368 = scalar_lea.vmem [#allocation3], %s367
        %v370 = vld [vmem:[%s0] sm:$0xff]
        %v371 = vld [vmem:[%s0 + $0x8] sm:$0xf]
        %v372 = vld [vmem:[%s0 + $0xc] sm:$0xff]
        %v373 = vld [vmem:[%s0 + $0x14] sm:$0xf]
        %v374 = vld [vmem:[%s0 + $0x18] sm:$0xff]
        %v375 = vld [vmem:[%s0 + $0x20] sm:$0xf]
        %v376 = vld [vmem:[%s351] sm:$0xf]
        %v377 = vld [vmem:[%s351 + $0x4] sm:$0xf]
        %v378 = vld [vmem:[%s351 + $0x8] sm:$0xf]
        %v379 = vld [vmem:[%s351 + $0xc] sm:$0xf]
        %v380 = vld [vmem:[%s351 + $0x10] sm:$0xf]
        %v381 = vld [vmem:[%s351 + $0x14] sm:$0xf]
        %v382 = vld [vmem:[%s351 + $0x18] sm:$0xf]
        %v383 = vld [vmem:[%s351 + $0x1c] sm:$0xf]
        %v384 = vld [vmem:[%s351 + $0x20] sm:$0xf]
        %v385 = vld [vmem:[%s351 + $0x24] sm:$0xf]
        %v386 = vld [vmem:[%s351 + $0x28] sm:$0xf]
        %v387 = vld [vmem:[%s351 + $0x2c] sm:$0xf]
        %v388 = vld [vmem:[%s351 + $0x30] sm:$0xf]
        %v389 = vld [vmem:[%s351 + $0x34] sm:$0xf]
        %v390 = vld [vmem:[%s351 + $0x38] sm:$0xf]
        %v391 = vld [vmem:[%s351 + $0x3c] sm:$0xf]
        %v392 = vld [vmem:[%s351 + $0x40] sm:$0xf]
        %v393 = vld [vmem:[%s351 + $0x44] sm:$0xf]
        %v394 = vld [vmem:[%s351 + $0x48] sm:$0xf]
        %v395 = vld [vmem:[%s351 + $0x4c] sm:$0xf]
        %v396 = vld [vmem:[%s351 + $0x50] sm:$0xf]
        %v397 = vld [vmem:[%s351 + $0x54] sm:$0xf]
        %v398 = vld [vmem:[%s351 + $0x58] sm:$0xf]
        %v399 = vld [vmem:[%s351 + $0x5c] sm:$0xf]
        %v400 = vld [vmem:[%s351 + $0x60] sm:$0xf]
        %v401 = vld [vmem:[%s351 + $0x64] sm:$0xf]
        %v402 = vld [vmem:[%s351 + $0x68] sm:$0xf]
        %v403 = vld [vmem:[%s351 + $0x6c] sm:$0xf]
        %v404 = vld [vmem:[%s351 + $0x70] sm:$0xf]
        %v405 = vld [vmem:[%s351 + $0x74] sm:$0xf]
        %v406 = vld [vmem:[%s351 + $0x78] sm:$0xf]
        %v407 = vld [vmem:[%s351 + $0x7c] sm:$0xf]
        %v408 = vld [vmem:[%s351 + $0x80] sm:$0xf]
        %v409 = vld [vmem:[%s351 + $0x84] sm:$0xf]
        %v410 = vld [vmem:[%s351 + $0x88] sm:$0xf]
        %v411 = vld [vmem:[%s351 + $0x8c] sm:$0xf]
        %v412 = vld [vmem:[%s351 + $0x90] sm:$0xf]
        %v413 = vld [vmem:[%s351 + $0x94] sm:$0xf]
        %v414 = vld [vmem:[%s351 + $0x98] sm:$0xf]
        %v415 = vld [vmem:[%s351 + $0x9c] sm:$0xf]
        %v416 = vld [vmem:[%s351 + $0xa0] sm:$0xf]
        %v417 = vld [vmem:[%s351 + $0xa4] sm:$0xf]
        %v418 = vld [vmem:[%s351 + $0xa8] sm:$0xf]
        %v419 = vld [vmem:[%s351 + $0xac] sm:$0xf]
        %v420 = vld [vmem:[%s351 + $0xb0] sm:$0xf]
        %v421 = vld [vmem:[%s351 + $0xb4] sm:$0xf]
        %v422 = vld [vmem:[%s351 + $0xb8] sm:$0xf]
        %v423 = vld [vmem:[%s351 + $0xbc] sm:$0xf]
        %v430 = vunpack.c.l.b16 %v370
        %v431 = vunpack.c.h.b16 %v370
        %v432 = vunpack.c.l.b16 %v371
        %v433 = vunpack.c.l.b16 %v372
        %v434 = vunpack.c.h.b16 %v372
        %v435 = vunpack.c.l.b16 %v373
        %v436 = vunpack.c.l.b16 %v374
        %v437 = vunpack.c.h.b16 %v374
        %v438 = vunpack.c.l.b16 %v375
        %v439 = vpack.c.b16 %v433, %v430
        %v440 = vpack.c.b16 %v434, %v431
        %v441 = vpack.c.b16 %v435, %v432
        %v442 = vpack.c.b16 %v436, %v436
        %v443 = vpack.c.b16 %v437, %v437
        %v444 = vpack.c.b16 %v438, %v438
        %v499 = vunpack.c.l.b16 %v376
        %v500 = vunpack.c.l.b16 %v377
        %v501 = vunpack.c.l.b16 %v378
        %v502 = vunpack.c.l.b16 %v379
        %v503 = vunpack.c.l.b16 %v380
        %v504 = vunpack.c.l.b16 %v381
        %v505 = vunpack.c.l.b16 %v382
        %v506 = vunpack.c.l.b16 %v383
        %v507 = vunpack.c.l.b16 %v384
        %v508 = vunpack.c.l.b16 %v385
        %v509 = vunpack.c.l.b16 %v386
        %v510 = vunpack.c.l.b16 %v387
        %v511 = vunpack.c.l.b16 %v388
        %v512 = vunpack.c.l.b16 %v389
        %v513 = vunpack.c.l.b16 %v390
        %v514 = vunpack.c.l.b16 %v391
        %v515 = vunpack.c.l.b16 %v392
        %v516 = vunpack.c.l.b16 %v393
        %v517 = vunpack.c.l.b16 %v394
        %v518 = vunpack.c.l.b16 %v395
        %v519 = vunpack.c.l.b16 %v396
        %v520 = vunpack.c.l.b16 %v397
        %v521 = vunpack.c.l.b16 %v398
        %v522 = vunpack.c.l.b16 %v399
        %v523 = vunpack.c.l.b16 %v400
        %v524 = vunpack.c.l.b16 %v401
        %v525 = vunpack.c.l.b16 %v402
        %v526 = vunpack.c.l.b16 %v403
        %v527 = vunpack.c.l.b16 %v404
        %v528 = vunpack.c.l.b16 %v405
        %v529 = vunpack.c.l.b16 %v406
        %v530 = vunpack.c.l.b16 %v407
        %v531 = vunpack.c.l.b16 %v408
        %v532 = vunpack.c.l.b16 %v409
        %v533 = vunpack.c.l.b16 %v410
        %v534 = vunpack.c.l.b16 %v411
        %v535 = vunpack.c.l.b16 %v412
        %v536 = vunpack.c.l.b16 %v413
        %v537 = vunpack.c.l.b16 %v414
        %v538 = vunpack.c.l.b16 %v415
        %v539 = vunpack.c.l.b16 %v416
        %v540 = vunpack.c.l.b16 %v417
        %v541 = vunpack.c.l.b16 %v418
        %v542 = vunpack.c.l.b16 %v419
        %v543 = vunpack.c.l.b16 %v420
        %v544 = vunpack.c.l.b16 %v421
        %v545 = vunpack.c.l.b16 %v422
        %v546 = vunpack.c.l.b16 %v423
        %v547 = vpack.c.b16 %v500, %v499
        %v548 = vpack.c.b16 %v502, %v501
        %v549 = vpack.c.b16 %v504, %v503
        %v550 = vpack.c.b16 %v506, %v505
        %v551 = vpack.c.b16 %v508, %v507
        %v552 = vpack.c.b16 %v510, %v509
        %v553 = vpack.c.b16 %v512, %v511
        %v554 = vpack.c.b16 %v514, %v513
        %v555 = vpack.c.b16 %v516, %v515
        %v556 = vpack.c.b16 %v518, %v517
        %v557 = vpack.c.b16 %v520, %v519
        %v558 = vpack.c.b16 %v522, %v521
        %v559 = vpack.c.b16 %v524, %v523
        %v560 = vpack.c.b16 %v526, %v525
        %v561 = vpack.c.b16 %v528, %v527
        %v562 = vpack.c.b16 %v530, %v529
        %v563 = vpack.c.b16 %v532, %v531
        %v564 = vpack.c.b16 %v534, %v533
        %v565 = vpack.c.b16 %v536, %v535
        %v566 = vpack.c.b16 %v538, %v537
        %v567 = vpack.c.b16 %v540, %v539
        %v568 = vpack.c.b16 %v542, %v541
        %v569 = vpack.c.b16 %v544, %v543
        %v570 = vpack.c.b16 %v546, %v545
        %595 = vmatprep.subr.bf16.mxu0 0
        %596 = vmatpush1.bf16.msra.mxu0 %v554
        %597 = vmatprep.subr.bf16.mxu0 0
        %598 = vmatpush1.bf16.msra.mxu0 %v553
        %599 = vmatprep.subr.bf16.mxu0 0
        %600 = vmatpush1.bf16.msra.mxu0 %v552
        %601 = vmatprep.subr.bf16.mxu0 0
        %602 = vmatpush1.bf16.msra.mxu0 %v551
        %603 = vmatprep.subr.bf16.mxu0 0
        %604 = vmatpush1.bf16.msra.mxu0 %v550
        %605 = vmatprep.subr.bf16.mxu0 0
        %606 = vmatpush1.bf16.msra.mxu0 %v549
        %607 = vmatprep.subr.bf16.mxu0 0
        %608 = vmatpush1.bf16.msra.mxu0 %v548
        %609 = vmatprep.subr.bf16.mxu0 0
        %610 = vmatpush1.bf16.msra.mxu0 %v547
        %611 = vmatprep.subr.bf16.mxu0 0
        %612 = vmatpush2.bf16.msra.mxu0 %v562
        %613 = vmatprep.subr.bf16.mxu0 0
        %614 = vmatpush2.bf16.msra.mxu0 %v561
        %615 = vmatprep.subr.bf16.mxu0 0
        %616 = vmatpush2.bf16.msra.mxu0 %v560
        %617 = vmatprep.subr.bf16.mxu0 0
        %618 = vmatpush2.bf16.msra.mxu0 %v559
        %619 = vmatprep.subr.bf16.mxu0 0
        %620 = vmatpush2.bf16.msra.mxu0 %v558
        %621 = vmatprep.subr.bf16.mxu0 0
        %622 = vmatpush2.bf16.msra.mxu0 %v557
        %623 = vmatprep.subr.bf16.mxu0 0
        %624 = vmatpush2.bf16.msra.mxu0 %v556
        %625 = vmatprep.subr.bf16.mxu0 0
        %626 = vmatpush2.bf16.msra.mxu0 %v555
        %627 = vmatprep.mubr.bf16.mxu0 %v440
        %628 = vmatmul.mubr.bf16.gmra.mxu0 %v439
        %v629 = vpop.f32.mrf.mxu0
        %v630 = vadd.f32 0.0, %v629
        %v631 = vpop.f32.mrf.mxu0
        %v632 = vpop.f32.mrf.mxu0
        %v633 = vadd.f32 0.0, %v632
        %v634 = vpop.f32.mrf.mxu0
        %635 = vmatprep.mubr.bf16.mxu0 %v443
        %636 = vmatmul.mubr.bf16.gmra.mxu0 %v442
        %v637 = vpop.f32.mrf.mxu0
        %v638 = vadd.f32 0.0, %v637
        %v639 = vpop.f32.mrf.mxu0
        %v640 = vpop.f32.mrf.mxu0
        %v641 = vpop.f32.mrf.mxu0
        %642 = vdwg.mxu0
        %643 = vmatprep.subr.bf16.mxu0 0
        %644 = vmatpush1.bf16.msra.mxu0 %v570
        %645 = vmatprep.subr.bf16.mxu0 0
        %646 = vmatpush1.bf16.msra.mxu0 %v569
        %647 = vmatprep.subr.bf16.mxu0 0
        %648 = vmatpush1.bf16.msra.mxu0 %v568
        %649 = vmatprep.subr.bf16.mxu0 0
        %650 = vmatpush1.bf16.msra.mxu0 %v567
        %651 = vmatprep.subr.bf16.mxu0 0
        %652 = vmatpush1.bf16.msra.mxu0 %v566
        %653 = vmatprep.subr.bf16.mxu0 0
        %654 = vmatpush1.bf16.msra.mxu0 %v565
        %655 = vmatprep.subr.bf16.mxu0 0
        %656 = vmatpush1.bf16.msra.mxu0 %v564
        %657 = vmatprep.subr.bf16.mxu0 0
        %658 = vmatpush1.bf16.msra.mxu0 %v563
        %659 = vmatprep.subr.bf16.mxu0 0
        %660 = vmatpush2.bf16.msra.mxu0 0
        %661 = vmatprep.subr.bf16.mxu0 0
        %662 = vmatpush2.bf16.msra.mxu0 0
        %663 = vmatprep.subr.bf16.mxu0 0
        %664 = vmatpush2.bf16.msra.mxu0 0
        %665 = vmatprep.subr.bf16.mxu0 0
        %666 = vmatpush2.bf16.msra.mxu0 0
        %667 = vmatprep.subr.bf16.mxu0 0
        %668 = vmatpush2.bf16.msra.mxu0 0
        %669 = vmatprep.subr.bf16.mxu0 0
        %670 = vmatpush2.bf16.msra.mxu0 0
        %671 = vmatprep.subr.bf16.mxu0 0
        %672 = vmatpush2.bf16.msra.mxu0 0
        %673 = vmatprep.subr.bf16.mxu0 0
        %674 = vmatpush2.bf16.msra.mxu0 0
        %675 = vmatprep.mubr.bf16.mxu0 0
        %676 = vmatmul.mubr.bf16.gmra.mxu0 %v441
        %v677 = vpop.f32.mrf.mxu0
        %v678 = vadd.f32 %v630, %v677
        %v679 = vpop.f32.mrf.mxu0
        %v680 = vpop.f32.mrf.mxu0
        %v681 = vadd.f32 %v633, %v680
        %v682 = vpop.f32.mrf.mxu0
        %683 = vmatprep.mubr.bf16.mxu0 0
        %684 = vmatmul.mubr.bf16.gmra.mxu0 %v444
        %v685 = vpop.f32.mrf.mxu0
        %v686 = vadd.f32 %v638, %v685
        %v687 = vpop.f32.mrf.mxu0
        %v688 = vpop.f32.mrf.mxu0
        %v689 = vpop.f32.mrf.mxu0
        %690 = vdwg.mxu0
        %691 = vst [vmem:[%s368] sm:$0xff] %v678
        %692 = vst [vmem:[%s368 + $0x8] sm:$0xff] %v681
        %693 = vst [vmem:[%s368 + $0x10] sm:$0xff] %v686
        %s694 = sand.u32 %s68, 1
        %s695 = sand.u32 %s68, 1
        %s696 = smul.addr %s695, 24
        %s697 = scalar_lea.vmem [#allocation3], %s696
        // Predicated region
        $region70: #{msswd_loss_forward.16} parent=64 // pred_check
          %p698 = pneg %p78
        $region71: #{msswd_loss_forward.16} parent=64 // pred_check_branch
          %700 = sbr.rel (%p698) target = $region73
        $region72: #{msswd_loss_forward.16} parent=64 // pred_region
          %s701 = smul.addr %s13, 8
          %s702 = scalar_lea.vmem %s2, %s701
          // Predicated region
          $region74: #{msswd_loss_forward.16} parent=72 // pred_check
            _
          $region75: #{msswd_loss_forward.16} parent=72 // pred_check_branch
            %704 = sbr.rel (0) target = $region77
          $region76: #{msswd_loss_forward.16} parent=72 // pred_region
            // Predicated region
            $region78: #{msswd_loss_forward.16} parent=76 // pred_check
              _
            $region79: #{msswd_loss_forward.16} parent=76 // pred_check_branch
              %706 = sbr.rel (0) target = $region81
            $region80: #{msswd_loss_forward.16} parent=76 // pred_region
              // Predicated region
              $region93: #{msswd_loss_forward.16} parent=80 // pred_check
                _
              $region94: #{msswd_loss_forward.16} parent=80 // pred_check_branch
                %726 = sbr.rel (0) target = $region96
              $region95: #{msswd_loss_forward.16} parent=80 // pred_region
                loop: start=0, step=1, limit=1
                $region97: #{msswd_loss_forward.16} parent=95 // loop_pre_header
                  _
                $region98: #{msswd_loss_forward.16} parent=95 // loop_header
                  %s728 = sphi 0, %s732
                  %p729 = scmp.ge.s32.totalorder %s728, 1
                  %s733 = sphi %s697, %s697
                  %s734 = sphi %s702, %s702
                $region99: #{msswd_loss_forward.16} parent=95 // loop_header_branch
                  %731 = sbr.rel (%p729) target = $region103
                $region100: #{msswd_loss_forward.16} parent=95 // loop_body
                  %v735 = vld [vmem:[%s733] sm:$0xff]
                  %736 = vst [vmem:[%s734] sm:$0xff] %v735
                  %v737 = vld [vmem:[%s733 + $0x8] sm:$0xff]
                  %738 = vst [vmem:[%s734 + $0x10] sm:$0xff] %v737
                  %v739 = vld [vmem:[%s733 + $0x10] sm:$0xff]
                  %740 = vst [vmem:[%s734 + $0x20] sm:$0xff] %v739
                $region101: #{msswd_loss_forward.16} parent=95 // loop_footer
                  %s732 = sadd.s32 1, %s728
                $region102: #{msswd_loss_forward.16} parent=95 // loop_footer_branch
                  %727 = sbr.rel target = $region98
                $region103: #{msswd_loss_forward.16} parent=95 // loop_exit
                  _
              $region96: #{msswd_loss_forward.16} parent=80 // pred_fallthru
                _
              // Predicated region
              $region104: #{msswd_loss_forward.16} parent=80 // pred_check
                _
              $region105: #{msswd_loss_forward.16} parent=80 // pred_check_branch
                %742 = sbr.rel target = $region107
              $region106: #{msswd_loss_forward.16} parent=80 // pred_region
                _
              $region107: #{msswd_loss_forward.16} parent=80 // pred_fallthru
                _
            $region81: #{msswd_loss_forward.16} parent=76 // pred_fallthru
              _
            // Predicated region
            $region82: #{msswd_loss_forward.16} parent=76 // pred_check
              _
            $region83: #{msswd_loss_forward.16} parent=76 // pred_check_branch
              %708 = sbr.rel target = $region85
            $region84: #{msswd_loss_forward.16} parent=76 // pred_region
              %s710 = ssub.s32 256, 1
              loop: start=0, step=1, limit=1
              $region86: #{msswd_loss_forward.16} parent=84 // loop_pre_header
                _
              $region87: #{msswd_loss_forward.16} parent=84 // loop_header
                %s712 = sphi 0, %s716
                %p713 = scmp.ge.s32.totalorder %s712, 1
                %s717 = sphi %s697, %s697
                %s718 = sphi %s702, %s702
              $region88: #{msswd_loss_forward.16} parent=84 // loop_header_branch
                %715 = sbr.rel (%p713) target = $region92
              $region89: #{msswd_loss_forward.16} parent=84 // loop_body
                %v719 = vld [vmem:[%s717] sm:%s710]
                %720 = vst [vmem:[%s718] sm:%s710] %v719
                %v721 = vld [vmem:[%s717 + $0x8] sm:%s710]
                %722 = vst [vmem:[%s718 + $0x10] sm:%s710] %v721
                %v723 = vld [vmem:[%s717 + $0x10] sm:%s710]
                %724 = vst [vmem:[%s718 + $0x20] sm:%s710] %v723
              $region90: #{msswd_loss_forward.16} parent=84 // loop_footer
                %s716 = sadd.s32 1, %s712
              $region91: #{msswd_loss_forward.16} parent=84 // loop_footer_branch
                %711 = sbr.rel target = $region87
              $region92: #{msswd_loss_forward.16} parent=84 // loop_exit
                _
            $region85: #{msswd_loss_forward.16} parent=76 // pred_fallthru
              _
          $region77: #{msswd_loss_forward.16} parent=72 // pred_fallthru
            _
          %743 = vnop
        $region73: #{msswd_loss_forward.16} parent=64 // pred_fallthru
          _
      $region65: #{msswd_loss_forward.16} parent=5 // pred_fallthru
        _
      %p744 = scmp.le.s32.totalorder 2, %s8
      // Predicated region
      $region108: #{msswd_loss_forward.16} parent=5 // pred_check
        %p745 = pneg %p744
      $region109: #{msswd_loss_forward.16} parent=5 // pred_check_branch
        %747 = sbr.rel (%p745) target = $region111
      $region110: #{msswd_loss_forward.16} parent=5 // pred_region
        %s748 = ssub.s32 %s8, 2
        // Predicated region
        $region112: #{msswd_loss_forward.16} parent=110 // pred_check
          %p749 = pneg %p84
        $region113: #{msswd_loss_forward.16} parent=110 // pred_check_branch
          %751 = sbr.rel (%p749) target = $region115
        $region114: #{msswd_loss_forward.16} parent=110 // pred_region
          %s752 = sand.u32 %s69, 1
          %s753 = sand.u32 %s69, 1
          %s754 = smul.addr %s753, 24
          %s755 = scalar_lea.vmem [#allocation3], %s754
        $region115: #{msswd_loss_forward.16} parent=110 // pred_fallthru
          _
      $region111: #{msswd_loss_forward.16} parent=5 // pred_fallthru
        _
    $region6: #{msswd_loss_forward.16} parent=1 // loop_footer
      %s12 = sadd.s32 1, %s8
    $region7: #{msswd_loss_forward.16} parent=1 // loop_footer_branch
      %7 = sbr.rel target = $region3
    $region8: #{msswd_loss_forward.16} parent=1 // loop_exit
      _

// kernel: msswd_loss_forward.17
$region0: #{msswd_loss_forward.17}
  #allocation0 [shape = 'u32[]', space=smem, size = 0x4, offset = 0x4, fixed_abs, tag = 'smem constant byte address 0x4 - core index']
  #allocation1 [shape = 'u32[144,128]{1,0:T(1,128)}', space=vmem, size = 0x12000, scoped, tag = 'internal scratch']
  %s0 = inlined_call_operand.vmem [shape: f32[24,2,36], index: 0, kind: input, shape index: {}]
  %s1 = inlined_call_operand.vmem [shape: f32[24,2,36], index: 1, kind: input, shape index: {}]
  %s2 = inlined_call_operand.vmem [shape: f32[2,128], index: 2, kind: output, shape index: {}]
  %s3 = sld [smem:[#allocation0]]
  $region18: #{msswd_loss_forward.17} parent=0
    _
  %s5 = ssub.s32 1, %s3
  %s6 = scalar_select 0, %s5, %s3
  // Predicated region
  $region2: #{msswd_loss_forward.17} parent=0 // pred_check
    _
  $region3: #{msswd_loss_forward.17} parent=0 // pred_check_branch
    %8 = sbr.rel (0) target = $region5
  $region4: #{msswd_loss_forward.17} parent=0 // pred_region
    _
  $region5: #{msswd_loss_forward.17} parent=0 // pred_fallthru
    _
  // Predicated region
  $region6: #{msswd_loss_forward.17} parent=0 // pred_check
    _
  $region7: #{msswd_loss_forward.17} parent=0 // pred_check_branch
    %10 = sbr.rel (0) target = $region9
  $region8: #{msswd_loss_forward.17} parent=0 // pred_region
    _
  $region9: #{msswd_loss_forward.17} parent=0 // pred_fallthru
    _
  %v11 = vld [vmem:[%s0] sm:$0x3]
  %v12 = vld [vmem:[%s0 + $0x2] sm:$0x3]
  %v13 = vld [vmem:[%s0 + $0x4] sm:$0x3]
  %v14 = vld [vmem:[%s0 + $0x6] sm:$0x3]
  %v15 = vld [vmem:[%s0 + $0x8] sm:$0x3]
  %v16 = vld [vmem:[%s0 + $0xa] sm:$0x3]
  %v17 = vld [vmem:[%s0 + $0xc] sm:$0x3]
  %v18 = vld [vmem:[%s0 + $0xe] sm:$0x3]
  %v19 = vld [vmem:[%s0 + $0x10] sm:$0x3]
  %v20 = vld [vmem:[%s0 + $0x12] sm:$0x3]
  %v21 = vld [vmem:[%s0 + $0x14] sm:$0x3]
  %v22 = vld [vmem:[%s0 + $0x16] sm:$0x3]
  %v23 = vld [vmem:[%s0 + $0x18] sm:$0x3]
  %v24 = vld [vmem:[%s0 + $0x1a] sm:$0x3]
  %v25 = vld [vmem:[%s0 + $0x1c] sm:$0x3]
  %v26 = vld [vmem:[%s0 + $0x1e] sm:$0x3]
  %v27 = vld [vmem:[%s0 + $0x20] sm:$0x3]
  %v28 = vld [vmem:[%s0 + $0x22] sm:$0x3]
  %v29 = vld [vmem:[%s0 + $0x24] sm:$0x3]
  %v30 = vld [vmem:[%s0 + $0x26] sm:$0x3]
  %v31 = vld [vmem:[%s0 + $0x28] sm:$0x3]
  %v32 = vld [vmem:[%s0 + $0x2a] sm:$0x3]
  %v33 = vld [vmem:[%s0 + $0x2c] sm:$0x3]
  %v34 = vld [vmem:[%s0 + $0x2e] sm:$0x3]
  %v35 = vld [vmem:[%s1] sm:$0x3]
  %v36 = vld [vmem:[%s1 + $0x2] sm:$0x3]
  %v37 = vld [vmem:[%s1 + $0x4] sm:$0x3]
  %v38 = vld [vmem:[%s1 + $0x6] sm:$0x3]
  %v39 = vld [vmem:[%s1 + $0x8] sm:$0x3]
  %v40 = vld [vmem:[%s1 + $0xa] sm:$0x3]
  %v41 = vld [vmem:[%s1 + $0xc] sm:$0x3]
  %v42 = vld [vmem:[%s1 + $0xe] sm:$0x3]
  %v43 = vld [vmem:[%s1 + $0x10] sm:$0x3]
  %v44 = vld [vmem:[%s1 + $0x12] sm:$0x3]
  %v45 = vld [vmem:[%s1 + $0x14] sm:$0x3]
  %v46 = vld [vmem:[%s1 + $0x16] sm:$0x3]
  %v47 = vld [vmem:[%s1 + $0x18] sm:$0x3]
  %v48 = vld [vmem:[%s1 + $0x1a] sm:$0x3]
  %v49 = vld [vmem:[%s1 + $0x1c] sm:$0x3]
  %v50 = vld [vmem:[%s1 + $0x1e] sm:$0x3]
  %v51 = vld [vmem:[%s1 + $0x20] sm:$0x3]
  %v52 = vld [vmem:[%s1 + $0x22] sm:$0x3]
  %v53 = vld [vmem:[%s1 + $0x24] sm:$0x3]
  %v54 = vld [vmem:[%s1 + $0x26] sm:$0x3]
  %v55 = vld [vmem:[%s1 + $0x28] sm:$0x3]
  %v56 = vld [vmem:[%s1 + $0x2a] sm:$0x3]
  %v57 = vld [vmem:[%s1 + $0x2c] sm:$0x3]
  %v58 = vld [vmem:[%s1 + $0x2e] sm:$0x3]
  %v59 = vsub.f32 %v11, %v35
  %v60 = vsub.f32 %v12, %v36
  %v61 = vsub.f32 %v13, %v37
  %v62 = vsub.f32 %v14, %v38
  %v63 = vsub.f32 %v15, %v39
  %v64 = vsub.f32 %v16, %v40
  %v65 = vsub.f32 %v17, %v41
  %v66 = vsub.f32 %v18, %v42
  %v67 = vsub.f32 %v19, %v43
  %v68 = vsub.f32 %v20, %v44
  %v69 = vsub.f32 %v21, %v45
  %v70 = vsub.f32 %v22, %v46
  %v71 = vsub.f32 %v23, %v47
  %v72 = vsub.f32 %v24, %v48
  %v73 = vsub.f32 %v25, %v49
  %v74 = vsub.f32 %v26, %v50
  %v75 = vsub.f32 %v27, %v51
  %v76 = vsub.f32 %v28, %v52
  %v77 = vsub.f32 %v29, %v53
  %v78 = vsub.f32 %v30, %v54
  %v79 = vsub.f32 %v31, %v55
  %v80 = vsub.f32 %v32, %v56
  %v81 = vsub.f32 %v33, %v57
  %v82 = vsub.f32 %v34, %v58
  %v83 = vand.u32 2147483647, %v59
  %v84 = vand.u32 2147483647, %v60
  %v85 = vand.u32 2147483647, %v61
  %v86 = vand.u32 2147483647, %v62
  %v87 = vand.u32 2147483647, %v63
  %v88 = vand.u32 2147483647, %v64
  %v89 = vand.u32 2147483647, %v65
  %v90 = vand.u32 2147483647, %v66
  %v91 = vand.u32 2147483647, %v67
  %v92 = vand.u32 2147483647, %v68
  %v93 = vand.u32 2147483647, %v69
  %v94 = vand.u32 2147483647, %v70
  %v95 = vand.u32 2147483647, %v71
  %v96 = vand.u32 2147483647, %v72
  %v97 = vand.u32 2147483647, %v73
  %v98 = vand.u32 2147483647, %v74
  %v99 = vand.u32 2147483647, %v75
  %v100 = vand.u32 2147483647, %v76
  %v101 = vand.u32 2147483647, %v77
  %v102 = vand.u32 2147483647, %v78
  %v103 = vand.u32 2147483647, %v79
  %v104 = vand.u32 2147483647, %v80
  %v105 = vand.u32 2147483647, %v81
  %v106 = vand.u32 2147483647, %v82
  %vm107 = vcmask 287744
  %v108 = vsel %vm107, %v83, 0.0
  %v109 = vsel %vm107, %v84, 0.0
  %v110 = vadd.f32 %v108, %v109
  %v111 = vsel %vm107, %v85, 0.0
  %v112 = vadd.f32 %v110, %v111
  %v113 = vsel %vm107, %v86, 0.0
  %v114 = vadd.f32 %v112, %v113
  %v115 = vsel %vm107, %v87, 0.0
  %v116 = vadd.f32 %v114, %v115
  %v117 = vsel %vm107, %v88, 0.0
  %v118 = vadd.f32 %v116, %v117
  %v119 = vsel %vm107, %v89, 0.0
  %v120 = vadd.f32 %v118, %v119
  %v121 = vsel %vm107, %v90, 0.0
  %v122 = vadd.f32 %v120, %v121
  %v123 = vsel %vm107, %v91, 0.0
  %v124 = vadd.f32 %v122, %v123
  %v125 = vsel %vm107, %v92, 0.0
  %v126 = vadd.f32 %v124, %v125
  %v127 = vsel %vm107, %v93, 0.0
  %v128 = vadd.f32 %v126, %v127
  %v129 = vsel %vm107, %v94, 0.0
  %v130 = vadd.f32 %v128, %v129
  %v131 = vsel %vm107, %v95, 0.0
  %v132 = vadd.f32 %v130, %v131
  %v133 = vsel %vm107, %v96, 0.0
  %v134 = vadd.f32 %v132, %v133
  %v135 = vsel %vm107, %v97, 0.0
  %v136 = vadd.f32 %v134, %v135
  %v137 = vsel %vm107, %v98, 0.0
  %v138 = vadd.f32 %v136, %v137
  %v139 = vsel %vm107, %v99, 0.0
  %v140 = vadd.f32 %v138, %v139
  %v141 = vsel %vm107, %v100, 0.0
  %v142 = vadd.f32 %v140, %v141
  %v143 = vsel %vm107, %v101, 0.0
  %v144 = vadd.f32 %v142, %v143
  %v145 = vsel %vm107, %v102, 0.0
  %v146 = vadd.f32 %v144, %v145
  %v147 = vsel %vm107, %v103, 0.0
  %v148 = vadd.f32 %v146, %v147
  %v149 = vsel %vm107, %v104, 0.0
  %v150 = vadd.f32 %v148, %v149
  %v151 = vsel %vm107, %v105, 0.0
  %v152 = vadd.f32 %v150, %v151
  %v153 = vsel %vm107, %v106, 0.0
  %v154 = vadd.f32 %v152, %v153
  %v155 = vsel %vm107, %v154, 0.0
  %156 = vadd.xlane.f32.xlu0 %v155
  %v157 = vpop.xlane.xlu0 %156
  %v158 = vrcp.pop 864.0
  %v159 = vmul.f32 %v157, %v158
  %160 = vst [vmem:[%s2] sm:$0x3] %v159
  // Predicated region
  $region10: #{msswd_loss_forward.17} parent=0 // pred_check
    _
  $region11: #{msswd_loss_forward.17} parent=0 // pred_check_branch
    %162 = sbr.rel (0) target = $region13
  $region12: #{msswd_loss_forward.17} parent=0 // pred_region
    _
  $region13: #{msswd_loss_forward.17} parent=0 // pred_fallthru
    _
  // Predicated region
  $region14: #{msswd_loss_forward.17} parent=0 // pred_check
    _
  $region15: #{msswd_loss_forward.17} parent=0 // pred_check_branch
    %164 = sbr.rel (0) target = $region17
  $region16: #{msswd_loss_forward.17} parent=0 // pred_region
    _
  $region17: #{msswd_loss_forward.17} parent=0 // pred_fallthru
    _

</llo_original>
